<compile_context>
chip_gen: v7x
topology: tpu7x:2x2x1
jax: 0.10.0
libtpu: 0.0.40
codegen_flags: <defaults>
</compile_context>

<pallas_src>
import functools
import math

import jax
import jax.numpy as jnp
from jax.experimental import pallas as pl
from jax.experimental.pallas import tpu as pltpu


# ----------------------------- Pallas kernel -------------------------------

def _gpt2_block_kernel(x_ref,
                       ln1w_ref, ln1b_ref,
                       wqkv_ref, bqkv_ref,
                       wpa_ref, bpa_ref,
                       ln2w_ref, ln2b_ref,
                       wfc_ref, bfc_ref,
                       wpm_ref, bpm_ref,
                       o_ref,
                       *, n_head: int):
    x = x_ref[0]                      # (T, C) f32
    T, C = x.shape
    hd = C // n_head
    scale = 1.0 / math.sqrt(hd)

    def layernorm(z, w, b):           # f32 throughout; w, b are (1, C)
        mu = jnp.mean(z, axis=-1, keepdims=True)
        var = jnp.mean((z - mu) ** 2, axis=-1, keepdims=True)
        return (z - mu) * jax.lax.rsqrt(var + 1e-5) * w + b

    # ---- attention branch --------------------------------------------------
    h = layernorm(x, ln1w_ref[...], ln1b_ref[...])
    qkv = jnp.dot(h.astype(jnp.bfloat16), wqkv_ref[...],
                  preferred_element_type=jnp.float32) + bqkv_ref[...]  # (T, 3C) f32
    q = qkv[:, :C]
    k = qkv[:, C:2 * C]
    v = qkv[:, 2 * C:]

    # Head-batched layout (n_head, T, hd); bf16 operands feed the MXU.
    qs = jnp.stack([q[:, i * hd:(i + 1) * hd] for i in range(n_head)], axis=0)
    ks = jnp.stack([k[:, i * hd:(i + 1) * hd] for i in range(n_head)], axis=0)
    vs = jnp.stack([v[:, i * hd:(i + 1) * hd] for i in range(n_head)], axis=0)
    qs = qs.astype(jnp.bfloat16)
    ks = (ks * scale).astype(jnp.bfloat16)   # fold 1/sqrt(hd) into the sdpa-query side
    vs = vs.astype(jnp.bfloat16)

    # Reference quirk: sdpa(k, q, v) -> query = k, key = q.
    att = jnp.einsum("htd,hsd->hts", ks, qs,
                     preferred_element_type=jnp.float32)               # (H, T, T) f32

    # Causal mask: query position (k-row) t may attend to key positions s <= t.
    row = jax.lax.broadcasted_iota(jnp.int32, (T, T), 0)
    col = jax.lax.broadcasted_iota(jnp.int32, (T, T), 1)
    att = jnp.where(col <= row, att, -1e30)

    att = att - jnp.max(att, axis=-1, keepdims=True)
    e = jnp.exp(att)
    p = e * pl.reciprocal(jnp.sum(e, axis=-1, keepdims=True), approx=True)

    yh = jnp.einsum("hts,hsd->htd", p.astype(jnp.bfloat16), vs,
                    preferred_element_type=jnp.float32)                # (H, T, hd) f32
    y = jnp.concatenate([yh[i] for i in range(n_head)], axis=-1)       # (T, C)
    y = jnp.dot(y.astype(jnp.bfloat16), wpa_ref[...],
                preferred_element_type=jnp.float32) + bpa_ref[...]

    x1 = x + y

    # ---- MLP branch ---------------------------------------------------------
    h2 = layernorm(x1, ln2w_ref[...], ln2b_ref[...])
    f = jnp.dot(h2.astype(jnp.bfloat16), wfc_ref[...],
                preferred_element_type=jnp.float32) + bfc_ref[...]
    # GELU (tanh approximation), matches nn.GELU(approximate='tanh'); f32, EUP tanh.
    c0 = math.sqrt(2.0 / math.pi)
    g = 0.5 * f * (1.0 + jnp.tanh(c0 * (f + 0.044715 * (f * f * f))))
    m = jnp.dot(g.astype(jnp.bfloat16), wpm_ref[...],
                preferred_element_type=jnp.float32) + bpm_ref[...]

    o_ref[0] = x1 + m


# ----------------------------- wrapper --------------------------------------

def gpt2_block(x, params, n_head):
    B, T, C = x.shape

    # Weight matrices go to bf16 for the MXU; biases / LayerNorm params stay f32.
    args = [
        params["ln1_w"], params["ln1_b"],
        params["w_qkv"].astype(jnp.bfloat16), params["b_qkv"],
        params["w_attn_proj"].astype(jnp.bfloat16), params["b_attn_proj"],
        params["ln2_w"], params["ln2_b"],
        params["w_fc"].astype(jnp.bfloat16), params["b_fc"],
        params["w_mlp_proj"].astype(jnp.bfloat16), params["b_mlp_proj"],
    ]

    # Constant index_map -> each weight block is DMA'd once and stays resident
    # in VMEM across the whole batch grid (no per-step re-fetch).
    param_specs = [pl.BlockSpec(p.shape, lambda b: (0, 0)) for p in args]

    return pl.pallas_call(
        functools.partial(_gpt2_block_kernel, n_head=n_head),
        out_shape=jax.ShapeDtypeStruct((B, T, C), x.dtype),
        grid=(B,),
        in_specs=[pl.BlockSpec((1, T, C), lambda b: (b, 0, 0))] + param_specs,
        out_specs=pl.BlockSpec((1, T, C), lambda b: (b, 0, 0)),
        compiler_params=pltpu.CompilerParams(
            dimension_semantics=("parallel",),
            vmem_limit_bytes=64 * 1024 * 1024,
        ),
    )(x, *args)


# ----------------------------- pure-JAX reference ----------------------------

def gpt2_block_ref(x, params, n_head):
    B, T, C = x.shape
    hd = C // n_head

    def ln(z, w, b):
        mu = jnp.mean(z, axis=-1, keepdims=True)
        var = jnp.mean((z - mu) ** 2, axis=-1, keepdims=True)
        return (z - mu) / jnp.sqrt(var + 1e-5) * w[0] + b[0]

    h = ln(x, params["ln1_w"], params["ln1_b"])
    qkv = h @ params["w_qkv"] + params["b_qkv"][0]
    q, k, v = jnp.split(qkv, 3, axis=-1)
    qh = q.reshape(B, T, n_head, hd).transpose(0, 2, 1, 3)
    kh = k.reshape(B, T, n_head, hd).transpose(0, 2, 1, 3)
    vh = v.reshape(B, T, n_head, hd).transpose(0, 2, 1, 3)
    # reference quirk: query = k, key = q
    att = jnp.einsum("bhtd,bhsd->bhts", kh, qh) / math.sqrt(hd)
    mask = jnp.tril(jnp.ones((T, T), dtype=bool))
    att = jnp.where(mask, att, -1e30)
    att = jax.nn.softmax(att, axis=-1)
    y = jnp.einsum("bhts,bhsd->bhtd", att, vh)
    y = y.transpose(0, 2, 1, 3).reshape(B, T, C)
    y = y @ params["w_attn_proj"] + params["b_attn_proj"][0]
    x1 = x + y

    h2 = ln(x1, params["ln2_w"], params["ln2_b"])
    f = h2 @ params["w_fc"] + params["b_fc"][0]
    g = 0.5 * f * (1.0 + jnp.tanh(math.sqrt(2.0 / math.pi) * (f + 0.044715 * f ** 3)))
    m = g @ params["w_mlp_proj"] + params["b_mlp_proj"][0]
    return x1 + m


# ----------------------------- main ------------------------------------------

if __name__ == "__main__":
    B, T, C, NH = 2, 8, 32, 4

    key = jax.random.PRNGKey(0)
    keys = jax.random.split(key, 10)

    params = {
        # LayerNorm: PyTorch default init (weight=1, bias=0), stored as (1, C)
        "ln1_w": jnp.ones((1, C), jnp.float32),
        "ln1_b": jnp.zeros((1, C), jnp.float32),
        "ln2_w": jnp.ones((1, C), jnp.float32),
        "ln2_b": jnp.zeros((1, C), jnp.float32),
        # Linear weights pre-transposed to (in, out); GPT-2-style N(0, 0.02) init
        "w_qkv": 0.02 * jax.random.normal(keys[0], (C, 3 * C), jnp.float32),
        "b_qkv": 0.02 * jax.random.normal(keys[1], (1, 3 * C), jnp.float32),
        "w_attn_proj": 0.02 * jax.random.normal(keys[2], (C, C), jnp.float32),
        "b_attn_proj": 0.02 * jax.random.normal(keys[3], (1, C), jnp.float32),
        "w_fc": 0.02 * jax.random.normal(keys[4], (C, 4 * C), jnp.float32),
        "b_fc": 0.02 * jax.random.normal(keys[5], (1, 4 * C), jnp.float32),
        "w_mlp_proj": 0.02 * jax.random.normal(keys[6], (4 * C, C), jnp.float32),
        "b_mlp_proj": 0.02 * jax.random.normal(keys[7], (1, C), jnp.float32),
    }

    x = jax.random.normal(keys[8], (B, T, C), jnp.float32)

    out = gpt2_block(x, params, NH)
    out = jax.block_until_ready(out)

    ref = gpt2_block_ref(x, params, NH)          # pure f32 reference
    err = float(jnp.max(jnp.abs(out - ref)))
    assert err < 1e-2, f"mismatch vs reference: {err}"

    print("KERNEL_OK")
</pallas_src>

<mosaic_0001>
module attributes {stable_mosaic.version = 11 : i64} {
  func.func @_gpt2_block_kernel(%arg0: i32, %arg1: memref<1x8x32xf32, #tpu.memory_space<vmem>>, %arg2: memref<1x32xf32, #tpu.memory_space<vmem>>, %arg3: memref<1x32xf32, #tpu.memory_space<vmem>>, %arg4: memref<32x96xbf16, #tpu.memory_space<vmem>>, %arg5: memref<1x96xf32, #tpu.memory_space<vmem>>, %arg6: memref<32x32xbf16, #tpu.memory_space<vmem>>, %arg7: memref<1x32xf32, #tpu.memory_space<vmem>>, %arg8: memref<1x32xf32, #tpu.memory_space<vmem>>, %arg9: memref<1x32xf32, #tpu.memory_space<vmem>>, %arg10: memref<32x128xbf16, #tpu.memory_space<vmem>>, %arg11: memref<1x128xf32, #tpu.memory_space<vmem>>, %arg12: memref<128x32xbf16, #tpu.memory_space<vmem>>, %arg13: memref<1x32xf32, #tpu.memory_space<vmem>>, %arg14: memref<1x8x32xf32, #tpu.memory_space<vmem>>) attributes {dimension_semantics = [#tpu.dimension_semantics<parallel>], iteration_bounds = array<i64: 2>, scalar_prefetch = 0 : i64, scratch_operands = 0 : i64, tpu.core_type = #tpu.core_type<tc>, window_params = [{transform_indices = @transform_0, window_bounds = array<i64: 1, 8, 32>}, {pipeline_mode = #tpu.pipeline_mode<synchronous>, transform_indices = @transform_1, window_bounds = array<i64: 1, 32>}, {pipeline_mode = #tpu.pipeline_mode<synchronous>, transform_indices = @transform_2, window_bounds = array<i64: 1, 32>}, {pipeline_mode = #tpu.pipeline_mode<synchronous>, transform_indices = @transform_3, window_bounds = array<i64: 32, 96>}, {pipeline_mode = #tpu.pipeline_mode<synchronous>, transform_indices = @transform_4, window_bounds = array<i64: 1, 96>}, {pipeline_mode = #tpu.pipeline_mode<synchronous>, transform_indices = @transform_5, window_bounds = array<i64: 32, 32>}, {pipeline_mode = #tpu.pipeline_mode<synchronous>, transform_indices = @transform_6, window_bounds = array<i64: 1, 32>}, {pipeline_mode = #tpu.pipeline_mode<synchronous>, transform_indices = @transform_7, window_bounds = array<i64: 1, 32>}, {pipeline_mode = #tpu.pipeline_mode<synchronous>, transform_indices = @transform_8, window_bounds = array<i64: 1, 32>}, {pipeline_mode = #tpu.pipeline_mode<synchronous>, transform_indices = @transform_9, window_bounds = array<i64: 32, 128>}, {pipeline_mode = #tpu.pipeline_mode<synchronous>, transform_indices = @transform_10, window_bounds = array<i64: 1, 128>}, {pipeline_mode = #tpu.pipeline_mode<synchronous>, transform_indices = @transform_11, window_bounds = array<i64: 128, 32>}, {pipeline_mode = #tpu.pipeline_mode<synchronous>, transform_indices = @transform_12, window_bounds = array<i64: 1, 32>}, {transform_indices = @transform_13, window_bounds = array<i64: 1, 8, 32>}]} {
    %c0 = arith.constant 0 : index
    %c0_0 = arith.constant 0 : index
    %c0_1 = arith.constant 0 : index
    %0 = vector.load %arg1[%c0, %c0_0, %c0_1] : memref<1x8x32xf32, #tpu.memory_space<vmem>>, vector<1x8x32xf32>
    %1 = vector.shape_cast %0 : vector<1x8x32xf32> to vector<8x32xf32>
    %c0_2 = arith.constant 0 : index
    %c0_3 = arith.constant 0 : index
    %2 = vector.load %arg2[%c0_2, %c0_3] : memref<1x32xf32, #tpu.memory_space<vmem>>, vector<1x32xf32>
    %c0_4 = arith.constant 0 : index
    %c0_5 = arith.constant 0 : index
    %3 = vector.load %arg3[%c0_4, %c0_5] : memref<1x32xf32, #tpu.memory_space<vmem>>, vector<1x32xf32>
    %cst = arith.constant dense<0.000000e+00> : vector<8xf32>
    %4 = vector.multi_reduction <add>, %1, %cst [1] : vector<8x32xf32> to vector<8xf32>
    %5 = vector.shape_cast %4 : vector<8xf32> to vector<8x1xf32>
    %cst_6 = arith.constant 3.200000e+01 : f32
    %6 = vector.broadcast %cst_6 : f32 to vector<8x1xf32>
    %7 = arith.divf %5, %6 : vector<8x1xf32>
    %8 = vector.broadcast %7 : vector<8x1xf32> to vector<8x32xf32>
    %9 = arith.subf %1, %8 : vector<8x32xf32>
    %10 = arith.mulf %9, %9 : vector<8x32xf32>
    %cst_7 = arith.constant dense<0.000000e+00> : vector<8xf32>
    %11 = vector.multi_reduction <add>, %10, %cst_7 [1] : vector<8x32xf32> to vector<8xf32>
    %12 = vector.shape_cast %11 : vector<8xf32> to vector<8x1xf32>
    %cst_8 = arith.constant 3.200000e+01 : f32
    %13 = vector.broadcast %cst_8 : f32 to vector<8x1xf32>
    %14 = arith.divf %12, %13 : vector<8x1xf32>
    %15 = vector.broadcast %7 : vector<8x1xf32> to vector<8x32xf32>
    %16 = arith.subf %1, %15 : vector<8x32xf32>
    %cst_9 = arith.constant 9.99999974E-6 : f32
    %17 = vector.broadcast %cst_9 : f32 to vector<8x1xf32>
    %18 = arith.addf %14, %17 : vector<8x1xf32>
    %19 = math.rsqrt %18 : vector<8x1xf32>
    %20 = vector.broadcast %19 : vector<8x1xf32> to vector<8x32xf32>
    %21 = arith.mulf %16, %20 : vector<8x32xf32>
    %22 = vector.broadcast %2 : vector<1x32xf32> to vector<8x32xf32>
    %23 = arith.mulf %21, %22 : vector<8x32xf32>
    %24 = vector.broadcast %3 : vector<1x32xf32> to vector<8x32xf32>
    %25 = arith.addf %23, %24 : vector<8x32xf32>
    %26 = arith.truncf %25 : vector<8x32xf32> to vector<8x32xbf16>
    %c0_10 = arith.constant 0 : index
    %c0_11 = arith.constant 0 : index
    %27 = vector.load %arg4[%c0_10, %c0_11] : memref<32x96xbf16, #tpu.memory_space<vmem>>, vector<32x96xbf16>
    %cst_12 = arith.constant dense<0.000000e+00> : vector<8x96xf32>
    %28 = tpu.matmul %26, %27, %cst_12 {dimension_numbers = #tpu.dot_dimension_numbers<[1], [0], [0], [1], [0, 0, 1, 1], [], []>} : vector<8x32xbf16>, vector<32x96xbf16>, vector<8x96xf32> -> vector<8x96xf32>
    %c0_13 = arith.constant 0 : index
    %c0_14 = arith.constant 0 : index
    %29 = vector.load %arg5[%c0_13, %c0_14] : memref<1x96xf32, #tpu.memory_space<vmem>>, vector<1x96xf32>
    %30 = vector.broadcast %29 : vector<1x96xf32> to vector<8x96xf32>
    %31 = arith.addf %28, %30 : vector<8x96xf32>
    %32 = vector.extract_strided_slice %31 {offsets = [0, 0], sizes = [8, 32], strides = [1, 1]} : vector<8x96xf32> to vector<8x32xf32>
    %33 = vector.extract_strided_slice %31 {offsets = [0, 32], sizes = [8, 32], strides = [1, 1]} : vector<8x96xf32> to vector<8x32xf32>
    %34 = vector.extract_strided_slice %31 {offsets = [0, 64], sizes = [8, 32], strides = [1, 1]} : vector<8x96xf32> to vector<8x32xf32>
    %35 = vector.extract_strided_slice %32 {offsets = [0, 0], sizes = [8, 8], strides = [1, 1]} : vector<8x32xf32> to vector<8x8xf32>
    %36 = vector.extract_strided_slice %32 {offsets = [0, 8], sizes = [8, 8], strides = [1, 1]} : vector<8x32xf32> to vector<8x8xf32>
    %37 = vector.extract_strided_slice %32 {offsets = [0, 16], sizes = [8, 8], strides = [1, 1]} : vector<8x32xf32> to vector<8x8xf32>
    %38 = vector.extract_strided_slice %32 {offsets = [0, 24], sizes = [8, 8], strides = [1, 1]} : vector<8x32xf32> to vector<8x8xf32>
    %39 = vector.shape_cast %35 : vector<8x8xf32> to vector<1x8x8xf32>
    %40 = vector.shape_cast %36 : vector<8x8xf32> to vector<1x8x8xf32>
    %41 = vector.shape_cast %37 : vector<8x8xf32> to vector<1x8x8xf32>
    %42 = vector.shape_cast %38 : vector<8x8xf32> to vector<1x8x8xf32>
    %43 = tpu.concatenate %39, %40, %41, %42 in 0 : vector<1x8x8xf32>, vector<1x8x8xf32>, vector<1x8x8xf32>, vector<1x8x8xf32> -> vector<4x8x8xf32>
    %44 = vector.extract_strided_slice %33 {offsets = [0, 0], sizes = [8, 8], strides = [1, 1]} : vector<8x32xf32> to vector<8x8xf32>
    %45 = vector.extract_strided_slice %33 {offsets = [0, 8], sizes = [8, 8], strides = [1, 1]} : vector<8x32xf32> to vector<8x8xf32>
    %46 = vector.extract_strided_slice %33 {offsets = [0, 16], sizes = [8, 8], strides = [1, 1]} : vector<8x32xf32> to vector<8x8xf32>
    %47 = vector.extract_strided_slice %33 {offsets = [0, 24], sizes = [8, 8], strides = [1, 1]} : vector<8x32xf32> to vector<8x8xf32>
    %48 = vector.shape_cast %44 : vector<8x8xf32> to vector<1x8x8xf32>
    %49 = vector.shape_cast %45 : vector<8x8xf32> to vector<1x8x8xf32>
    %50 = vector.shape_cast %46 : vector<8x8xf32> to vector<1x8x8xf32>
    %51 = vector.shape_cast %47 : vector<8x8xf32> to vector<1x8x8xf32>
    %52 = tpu.concatenate %48, %49, %50, %51 in 0 : vector<1x8x8xf32>, vector<1x8x8xf32>, vector<1x8x8xf32>, vector<1x8x8xf32> -> vector<4x8x8xf32>
    %53 = vector.extract_strided_slice %34 {offsets = [0, 0], sizes = [8, 8], strides = [1, 1]} : vector<8x32xf32> to vector<8x8xf32>
    %54 = vector.extract_strided_slice %34 {offsets = [0, 8], sizes = [8, 8], strides = [1, 1]} : vector<8x32xf32> to vector<8x8xf32>
    %55 = vector.extract_strided_slice %34 {offsets = [0, 16], sizes = [8, 8], strides = [1, 1]} : vector<8x32xf32> to vector<8x8xf32>
    %56 = vector.extract_strided_slice %34 {offsets = [0, 24], sizes = [8, 8], strides = [1, 1]} : vector<8x32xf32> to vector<8x8xf32>
    %57 = vector.shape_cast %53 : vector<8x8xf32> to vector<1x8x8xf32>
    %58 = vector.shape_cast %54 : vector<8x8xf32> to vector<1x8x8xf32>
    %59 = vector.shape_cast %55 : vector<8x8xf32> to vector<1x8x8xf32>
    %60 = vector.shape_cast %56 : vector<8x8xf32> to vector<1x8x8xf32>
    %61 = tpu.concatenate %57, %58, %59, %60 in 0 : vector<1x8x8xf32>, vector<1x8x8xf32>, vector<1x8x8xf32>, vector<1x8x8xf32> -> vector<4x8x8xf32>
    %62 = arith.truncf %43 : vector<4x8x8xf32> to vector<4x8x8xbf16>
    %cst_15 = arith.constant 0.353553385 : f32
    %63 = vector.broadcast %cst_15 : f32 to vector<4x8x8xf32>
    %64 = arith.mulf %52, %63 : vector<4x8x8xf32>
    %65 = arith.truncf %64 : vector<4x8x8xf32> to vector<4x8x8xbf16>
    %66 = arith.truncf %61 : vector<4x8x8xf32> to vector<4x8x8xbf16>
    "tpu.trace_start"() <{level = 10 : i32, message = "htd,hsd->hts"}> : () -> ()
    %cst_16 = arith.constant dense<0.000000e+00> : vector<4x8x8xf32>
    %67 = tpu.matmul %65, %62, %cst_16 {dimension_numbers = #tpu.dot_dimension_numbers<[2], [2], [1], [1], [0, 0, 0, 1, 1, 1], [0], [0]>} : vector<4x8x8xbf16>, vector<4x8x8xbf16>, vector<4x8x8xf32> -> vector<4x8x8xf32>
    "tpu.trace_stop"() : () -> ()
    %68 = tpu.iota {dimensions = array<i32: 0>} : vector<8x8xi32>
    %69 = tpu.iota {dimensions = array<i32: 1>} : vector<8x8xi32>
    %70 = arith.cmpi sle, %69, %68 : vector<8x8xi32>
    %cst_17 = arith.constant -1.000000e+30 : f32
    %71 = vector.shape_cast %70 : vector<8x8xi1> to vector<1x8x8xi1>
    %72 = vector.broadcast %71 : vector<1x8x8xi1> to vector<4x8x8xi1>
    %73 = vector.broadcast %cst_17 : f32 to vector<4x8x8xf32>
    %74 = arith.select %72, %67, %73 : vector<4x8x8xi1>, vector<4x8x8xf32>
    %cst_18 = arith.constant dense<0xFF800000> : vector<4x8xf32>
    %75 = vector.multi_reduction <maximumf>, %74, %cst_18 [2] : vector<4x8x8xf32> to vector<4x8xf32>
    %76 = vector.shape_cast %75 : vector<4x8xf32> to vector<4x8x1xf32>
    %77 = vector.broadcast %76 : vector<4x8x1xf32> to vector<4x8x8xf32>
    %78 = arith.subf %74, %77 : vector<4x8x8xf32>
    %79 = math.exp %78 : vector<4x8x8xf32>
    %cst_19 = arith.constant dense<0.000000e+00> : vector<4x8xf32>
    %80 = vector.multi_reduction <add>, %79, %cst_19 [2] : vector<4x8x8xf32> to vector<4x8xf32>
    %81 = vector.shape_cast %80 : vector<4x8xf32> to vector<4x8x1xf32>
    %82 = tpu.reciprocal %81 {approx = true} : vector<4x8x1xf32> -> vector<4x8x1xf32>
    %83 = vector.broadcast %82 : vector<4x8x1xf32> to vector<4x8x8xf32>
    %84 = arith.mulf %79, %83 : vector<4x8x8xf32>
    %85 = arith.truncf %84 : vector<4x8x8xf32> to vector<4x8x8xbf16>
    "tpu.trace_start"() <{level = 10 : i32, message = "hts,hsd->htd"}> : () -> ()
    %cst_20 = arith.constant dense<0.000000e+00> : vector<4x8x8xf32>
    %86 = tpu.matmul %85, %66, %cst_20 {dimension_numbers = #tpu.dot_dimension_numbers<[2], [1], [1], [2], [0, 0, 0, 1, 1, 2], [0], [0]>} : vector<4x8x8xbf16>, vector<4x8x8xbf16>, vector<4x8x8xf32> -> vector<4x8x8xf32>
    "tpu.trace_stop"() : () -> ()
    %87 = vector.extract_strided_slice %86 {offsets = [0, 0, 0], sizes = [1, 8, 8], strides = [1, 1, 1]} : vector<4x8x8xf32> to vector<1x8x8xf32>
    %88 = vector.shape_cast %87 : vector<1x8x8xf32> to vector<8x8xf32>
    %89 = vector.extract_strided_slice %86 {offsets = [1, 0, 0], sizes = [1, 8, 8], strides = [1, 1, 1]} : vector<4x8x8xf32> to vector<1x8x8xf32>
    %90 = vector.shape_cast %89 : vector<1x8x8xf32> to vector<8x8xf32>
    %91 = vector.extract_strided_slice %86 {offsets = [2, 0, 0], sizes = [1, 8, 8], strides = [1, 1, 1]} : vector<4x8x8xf32> to vector<1x8x8xf32>
    %92 = vector.shape_cast %91 : vector<1x8x8xf32> to vector<8x8xf32>
    %93 = vector.extract_strided_slice %86 {offsets = [3, 0, 0], sizes = [1, 8, 8], strides = [1, 1, 1]} : vector<4x8x8xf32> to vector<1x8x8xf32>
    %94 = vector.shape_cast %93 : vector<1x8x8xf32> to vector<8x8xf32>
    %95 = tpu.concatenate %88, %90, %92, %94 in 1 : vector<8x8xf32>, vector<8x8xf32>, vector<8x8xf32>, vector<8x8xf32> -> vector<8x32xf32>
    %96 = arith.truncf %95 : vector<8x32xf32> to vector<8x32xbf16>
    %c0_21 = arith.constant 0 : index
    %c0_22 = arith.constant 0 : index
    %97 = vector.load %arg6[%c0_21, %c0_22] : memref<32x32xbf16, #tpu.memory_space<vmem>>, vector<32x32xbf16>
    %cst_23 = arith.constant dense<0.000000e+00> : vector<8x32xf32>
    %98 = tpu.matmul %96, %97, %cst_23 {dimension_numbers = #tpu.dot_dimension_numbers<[1], [0], [0], [1], [0, 0, 1, 1], [], []>} : vector<8x32xbf16>, vector<32x32xbf16>, vector<8x32xf32> -> vector<8x32xf32>
    %c0_24 = arith.constant 0 : index
    %c0_25 = arith.constant 0 : index
    %99 = vector.load %arg7[%c0_24, %c0_25] : memref<1x32xf32, #tpu.memory_space<vmem>>, vector<1x32xf32>
    %100 = vector.broadcast %99 : vector<1x32xf32> to vector<8x32xf32>
    %101 = arith.addf %98, %100 : vector<8x32xf32>
    %102 = arith.addf %1, %101 : vector<8x32xf32>
    %c0_26 = arith.constant 0 : index
    %c0_27 = arith.constant 0 : index
    %103 = vector.load %arg8[%c0_26, %c0_27] : memref<1x32xf32, #tpu.memory_space<vmem>>, vector<1x32xf32>
    %c0_28 = arith.constant 0 : index
    %c0_29 = arith.constant 0 : index
    %104 = vector.load %arg9[%c0_28, %c0_29] : memref<1x32xf32, #tpu.memory_space<vmem>>, vector<1x32xf32>
    %cst_30 = arith.constant dense<0.000000e+00> : vector<8xf32>
    %105 = vector.multi_reduction <add>, %102, %cst_30 [1] : vector<8x32xf32> to vector<8xf32>
    %106 = vector.shape_cast %105 : vector<8xf32> to vector<8x1xf32>
    %cst_31 = arith.constant 3.200000e+01 : f32
    %107 = vector.broadcast %cst_31 : f32 to vector<8x1xf32>
    %108 = arith.divf %106, %107 : vector<8x1xf32>
    %109 = vector.broadcast %108 : vector<8x1xf32> to vector<8x32xf32>
    %110 = arith.subf %102, %109 : vector<8x32xf32>
    %111 = arith.mulf %110, %110 : vector<8x32xf32>
    %cst_32 = arith.constant dense<0.000000e+00> : vector<8xf32>
    %112 = vector.multi_reduction <add>, %111, %cst_32 [1] : vector<8x32xf32> to vector<8xf32>
    %113 = vector.shape_cast %112 : vector<8xf32> to vector<8x1xf32>
    %cst_33 = arith.constant 3.200000e+01 : f32
    %114 = vector.broadcast %cst_33 : f32 to vector<8x1xf32>
    %115 = arith.divf %113, %114 : vector<8x1xf32>
    %116 = vector.broadcast %108 : vector<8x1xf32> to vector<8x32xf32>
    %117 = arith.subf %102, %116 : vector<8x32xf32>
    %cst_34 = arith.constant 9.99999974E-6 : f32
    %118 = vector.broadcast %cst_34 : f32 to vector<8x1xf32>
    %119 = arith.addf %115, %118 : vector<8x1xf32>
    %120 = math.rsqrt %119 : vector<8x1xf32>
    %121 = vector.broadcast %120 : vector<8x1xf32> to vector<8x32xf32>
    %122 = arith.mulf %117, %121 : vector<8x32xf32>
    %123 = vector.broadcast %103 : vector<1x32xf32> to vector<8x32xf32>
    %124 = arith.mulf %122, %123 : vector<8x32xf32>
    %125 = vector.broadcast %104 : vector<1x32xf32> to vector<8x32xf32>
    %126 = arith.addf %124, %125 : vector<8x32xf32>
    %127 = arith.truncf %126 : vector<8x32xf32> to vector<8x32xbf16>
    %c0_35 = arith.constant 0 : index
    %c0_36 = arith.constant 0 : index
    %128 = vector.load %arg10[%c0_35, %c0_36] : memref<32x128xbf16, #tpu.memory_space<vmem>>, vector<32x128xbf16>
    %cst_37 = arith.constant dense<0.000000e+00> : vector<8x128xf32>
    %129 = tpu.matmul %127, %128, %cst_37 {dimension_numbers = #tpu.dot_dimension_numbers<[1], [0], [0], [1], [0, 0, 1, 1], [], []>} : vector<8x32xbf16>, vector<32x128xbf16>, vector<8x128xf32> -> vector<8x128xf32>
    %c0_38 = arith.constant 0 : index
    %c0_39 = arith.constant 0 : index
    %130 = vector.load %arg11[%c0_38, %c0_39] : memref<1x128xf32, #tpu.memory_space<vmem>>, vector<1x128xf32>
    %131 = vector.broadcast %130 : vector<1x128xf32> to vector<8x128xf32>
    %132 = arith.addf %129, %131 : vector<8x128xf32>
    %cst_40 = arith.constant 5.000000e-01 : f32
    %133 = vector.broadcast %cst_40 : f32 to vector<8x128xf32>
    %134 = arith.mulf %133, %132 : vector<8x128xf32>
    %135 = arith.mulf %132, %132 : vector<8x128xf32>
    %136 = arith.mulf %135, %132 : vector<8x128xf32>
    %cst_41 = arith.constant 4.471500e-02 : f32
    %137 = vector.broadcast %cst_41 : f32 to vector<8x128xf32>
    %138 = arith.mulf %137, %136 : vector<8x128xf32>
    %139 = arith.addf %132, %138 : vector<8x128xf32>
    %cst_42 = arith.constant 0.797884583 : f32
    %140 = vector.broadcast %cst_42 : f32 to vector<8x128xf32>
    %141 = arith.mulf %140, %139 : vector<8x128xf32>
    %142 = math.tanh %141 : vector<8x128xf32>
    %cst_43 = arith.constant 1.000000e+00 : f32
    %143 = vector.broadcast %cst_43 : f32 to vector<8x128xf32>
    %144 = arith.addf %143, %142 : vector<8x128xf32>
    %145 = arith.mulf %134, %144 : vector<8x128xf32>
    %146 = arith.truncf %145 : vector<8x128xf32> to vector<8x128xbf16>
    %c0_44 = arith.constant 0 : index
    %c0_45 = arith.constant 0 : index
    %147 = vector.load %arg12[%c0_44, %c0_45] : memref<128x32xbf16, #tpu.memory_space<vmem>>, vector<128x32xbf16>
    %cst_46 = arith.constant dense<0.000000e+00> : vector<8x32xf32>
    %148 = tpu.matmul %146, %147, %cst_46 {dimension_numbers = #tpu.dot_dimension_numbers<[1], [0], [0], [1], [0, 0, 1, 1], [], []>} : vector<8x128xbf16>, vector<128x32xbf16>, vector<8x32xf32> -> vector<8x32xf32>
    %c0_47 = arith.constant 0 : index
    %c0_48 = arith.constant 0 : index
    %149 = vector.load %arg13[%c0_47, %c0_48] : memref<1x32xf32, #tpu.memory_space<vmem>>, vector<1x32xf32>
    %150 = vector.broadcast %149 : vector<1x32xf32> to vector<8x32xf32>
    %151 = arith.addf %148, %150 : vector<8x32xf32>
    %152 = arith.addf %102, %151 : vector<8x32xf32>
    %c0_49 = arith.constant 0 : index
    %c0_50 = arith.constant 0 : index
    %c0_51 = arith.constant 0 : index
    %153 = vector.load %arg14[%c0_49, %c0_50, %c0_51] : memref<1x8x32xf32, #tpu.memory_space<vmem>>, vector<1x8x32xf32>
    %154 = vector.shape_cast %153 : vector<1x8x32xf32> to vector<8x32xf32>
    %155 = vector.shape_cast %152 : vector<8x32xf32> to vector<1x8x32xf32>
    tpu.vector_store %arg14[%c0_49, %c0_50, %c0_51], %155 {strides = array<i32>} : memref<1x8x32xf32, #tpu.memory_space<vmem>>, vector<1x8x32xf32>,
    return
  }
  func.func @transform_0(%arg0: i32) -> (i32, i32, i32) {
    %c0_i32 = arith.constant 0 : i32
    %c0_i32_0 = arith.constant 0 : i32
    %c0_i32_1 = arith.constant 0 : i32
    return %arg0, %c0_i32, %c0_i32_0 : i32, i32, i32
  }
  func.func @transform_1(%arg0: i32) -> (i32, i32) {
    %c0_i32 = arith.constant 0 : i32
    %c0_i32_0 = arith.constant 0 : i32
    %c0_i32_1 = arith.constant 0 : i32
    return %c0_i32, %c0_i32_0 : i32, i32
  }
  func.func @transform_2(%arg0: i32) -> (i32, i32) {
    %c0_i32 = arith.constant 0 : i32
    %c0_i32_0 = arith.constant 0 : i32
    %c0_i32_1 = arith.constant 0 : i32
    return %c0_i32, %c0_i32_0 : i32, i32
  }
  func.func @transform_3(%arg0: i32) -> (i32, i32) {
    %c0_i32 = arith.constant 0 : i32
    %c0_i32_0 = arith.constant 0 : i32
    %c0_i32_1 = arith.constant 0 : i32
    return %c0_i32, %c0_i32_0 : i32, i32
  }
  func.func @transform_4(%arg0: i32) -> (i32, i32) {
    %c0_i32 = arith.constant 0 : i32
    %c0_i32_0 = arith.constant 0 : i32
    %c0_i32_1 = arith.constant 0 : i32
    return %c0_i32, %c0_i32_0 : i32, i32
  }
  func.func @transform_5(%arg0: i32) -> (i32, i32) {
    %c0_i32 = arith.constant 0 : i32
    %c0_i32_0 = arith.constant 0 : i32
    %c0_i32_1 = arith.constant 0 : i32
    return %c0_i32, %c0_i32_0 : i32, i32
  }
  func.func @transform_6(%arg0: i32) -> (i32, i32) {
    %c0_i32 = arith.constant 0 : i32
    %c0_i32_0 = arith.constant 0 : i32
    %c0_i32_1 = arith.constant 0 : i32
    return %c0_i32, %c0_i32_0 : i32, i32
  }
  func.func @transform_7(%arg0: i32) -> (i32, i32) {
    %c0_i32 = arith.constant 0 : i32
    %c0_i32_0 = arith.constant 0 : i32
    %c0_i32_1 = arith.constant 0 : i32
    return %c0_i32, %c0_i32_0 : i32, i32
  }
  func.func @transform_8(%arg0: i32) -> (i32, i32) {
    %c0_i32 = arith.constant 0 : i32
    %c0_i32_0 = arith.constant 0 : i32
    %c0_i32_1 = arith.constant 0 : i32
    return %c0_i32, %c0_i32_0 : i32, i32
  }
  func.func @transform_9(%arg0: i32) -> (i32, i32) {
    %c0_i32 = arith.constant 0 : i32
    %c0_i32_0 = arith.constant 0 : i32
    %c0_i32_1 = arith.constant 0 : i32
    return %c0_i32, %c0_i32_0 : i32, i32
  }
  func.func @transform_10(%arg0: i32) -> (i32, i32) {
    %c0_i32 = arith.constant 0 : i32
    %c0_i32_0 = arith.constant 0 : i32
    %c0_i32_1 = arith.constant 0 : i32
    return %c0_i32, %c0_i32_0 : i32, i32
  }
  func.func @transform_11(%arg0: i32) -> (i32, i32) {
    %c0_i32 = arith.constant 0 : i32
    %c0_i32_0 = arith.constant 0 : i32
    %c0_i32_1 = arith.constant 0 : i32
    return %c0_i32, %c0_i32_0 : i32, i32
  }
  func.func @transform_12(%arg0: i32) -> (i32, i32) {
    %c0_i32 = arith.constant 0 : i32
    %c0_i32_0 = arith.constant 0 : i32
    %c0_i32_1 = arith.constant 0 : i32
    return %c0_i32, %c0_i32_0 : i32, i32
  }
  func.func @transform_13(%arg0: i32) -> (i32, i32, i32) {
    %c0_i32 = arith.constant 0 : i32
    %c0_i32_0 = arith.constant 0 : i32
    %c0_i32_1 = arith.constant 0 : i32
    return %arg0, %c0_i32, %c0_i32_0 : i32, i32, i32
  }
}

</mosaic_0001>

<llo_original>
// kernel: tpu_custom_call.1
$region0: #{tpu_custom_call.1}
  #allocation0 [shape = 'u32[]', space=smem, size = 0x4, offset = 0x4, fixed_abs, tag = 'smem constant byte address 0x4 - core index']
  #allocation1 [shape = 'u32[144,128]{1,0:T(1,128)}', space=vmem, size = 0x12000, scoped, tag = 'internal scratch']
  %s0 = inlined_call_operand.hbm [shape: f32[2,8,32], index: 0, kind: input, shape index: {}]
  %s1 = inlined_call_operand.hbm [shape: f32[1,32], index: 1, kind: input, shape index: {}]
  %s2 = inlined_call_operand.hbm [shape: f32[1,32], index: 2, kind: input, shape index: {}]
  %s3 = inlined_call_operand.hbm [shape: bf16[32,96], index: 3, kind: input, shape index: {}]
  %s4 = inlined_call_operand.hbm [shape: f32[1,96], index: 4, kind: input, shape index: {}]
  %s5 = inlined_call_operand.hbm [shape: bf16[32,32], index: 5, kind: input, shape index: {}]
  %s6 = inlined_call_operand.hbm [shape: f32[1,32], index: 6, kind: input, shape index: {}]
  %s7 = inlined_call_operand.hbm [shape: f32[1,32], index: 7, kind: input, shape index: {}]
  %s8 = inlined_call_operand.hbm [shape: f32[1,32], index: 8, kind: input, shape index: {}]
  %s9 = inlined_call_operand.hbm [shape: bf16[32,128], index: 9, kind: input, shape index: {}]
  %s10 = inlined_call_operand.hbm [shape: f32[1,128], index: 10, kind: input, shape index: {}]
  %s11 = inlined_call_operand.hbm [shape: bf16[128,32], index: 11, kind: input, shape index: {}]
  %s12 = inlined_call_operand.hbm [shape: f32[1,32], index: 12, kind: input, shape index: {}]
  %s13 = inlined_call_operand.hbm [shape: f32[2,8,32], index: 13, kind: output, shape index: {}]
  %s14 = sld [smem:[#allocation0]]
  $region137: #{tpu_custom_call.1} parent=0
    _
  %s16 = ssub.s32 1, %s14
  %s17 = scalar_select 0, %s16, %s14
  $region1: #{tpu_custom_call.1} parent=0
    #allocation2 [shape = 'u8[8192]{0}', space=vmem, size = 0x2000, scoped, tag = 'input window, operand 0']
    #allocation3 [shape = 's32[2]{0}', space=sflag, size = 0x8, scoped, tag = 'scoped memory for tpu_custom_call.1']
    #allocation4 [shape = 's32[2]{0}', space=sflag, size = 0x8, scoped, tag = 'scoped memory for tpu_custom_call.1']
    #allocation5 [shape = 'u8[512]{0}', space=vmem, size = 0x400, scoped, tag = 'input window, operand 1, single buffered']
    #allocation6 [shape = 's32[1]{0}', space=sflag, size = 0x4, scoped, tag = 'scoped memory for tpu_custom_call.1']
    #allocation7 [shape = 'u8[512]{0}', space=vmem, size = 0x400, scoped, tag = 'input window, operand 2, single buffered']
    #allocation8 [shape = 'u8[8192]{0}', space=vmem, size = 0x2000, scoped, tag = 'input window, operand 3, single buffered']
    #allocation9 [shape = 's32[1]{0}', space=sflag, size = 0x4, scoped, tag = 'scoped memory for tpu_custom_call.1']
    #allocation10 [shape = 'u8[512]{0}', space=vmem, size = 0x400, scoped, tag = 'input window, operand 4, single buffered']
    #allocation11 [shape = 'u8[8192]{0}', space=vmem, size = 0x2000, scoped, tag = 'input window, operand 5, single buffered']
    #allocation12 [shape = 's32[1]{0}', space=sflag, size = 0x4, scoped, tag = 'scoped memory for tpu_custom_call.1']
    #allocation13 [shape = 'u8[512]{0}', space=vmem, size = 0x400, scoped, tag = 'input window, operand 6, single buffered']
    #allocation14 [shape = 'u8[512]{0}', space=vmem, size = 0x400, scoped, tag = 'input window, operand 7, single buffered']
    #allocation15 [shape = 's32[1]{0}', space=sflag, size = 0x4, scoped, tag = 'scoped memory for tpu_custom_call.1']
    #allocation16 [shape = 'u8[512]{0}', space=vmem, size = 0x400, scoped, tag = 'input window, operand 8, single buffered']
    #allocation17 [shape = 'u8[8192]{0}', space=vmem, size = 0x2000, scoped, tag = 'input window, operand 9, single buffered']
    #allocation18 [shape = 's32[1]{0}', space=sflag, size = 0x4, scoped, tag = 'scoped memory for tpu_custom_call.1']
    #allocation19 [shape = 'u8[512]{0}', space=vmem, size = 0x400, scoped, tag = 'input window, operand 10, single buffered']
    #allocation20 [shape = 'u8[32768]{0}', space=vmem, size = 0x8000, scoped, tag = 'input window, operand 11, single buffered']
    #allocation21 [shape = 's32[1]{0}', space=sflag, size = 0x4, scoped, tag = 'scoped memory for tpu_custom_call.1']
    #allocation22 [shape = 'u8[512]{0}', space=vmem, size = 0x400, scoped, tag = 'input window, operand 12, single buffered']
    #allocation23 [shape = 'u8[8192]{0}', space=vmem, size = 0x2000, scoped, tag = 'output window, operand 0']
    %18 = vsyncpa [#allocation3], 0
    %s19 = scalar_lea.sflag [#allocation3], 1
    %20 = vsyncpa %s19, 0
    %21 = vsyncpa [#allocation6], 0
    %22 = vsyncpa [#allocation9], 0
    %23 = vsyncpa [#allocation12], 0
    %24 = vsyncpa [#allocation15], 0
    %25 = vsyncpa [#allocation18], 0
    %26 = vsyncpa [#allocation21], 0
    %27 = vsyncpa [#allocation4], 0
    %s28 = scalar_lea.sflag [#allocation4], 1
    %29 = vsyncpa %s28, 0
    loop: start=0, step=1, limit=4
    $region2: #{tpu_custom_call.1} parent=1 // loop_pre_header
      _
    $region3: #{tpu_custom_call.1} parent=1 // loop_header
      %s31 = sphi 0, %s35
      %p32 = scmp.ge.s32.totalorder %s31, 4
      %s41 = sphi 0, %s43
      %s44 = sphi 0, %s41
      %s45 = sphi 0, %s44
      %s61 = sphi 0, %s45
      %s65 = sphi 0, %s65
      %s67 = sphi 0, %s65
      %s68 = sphi 0, %s67
      %s82 = sphi 0, %s68
      %s86 = sphi 0, %s86
      %s88 = sphi 0, %s86
      %s89 = sphi 0, %s88
      %s103 = sphi 0, %s89
      %s107 = sphi 0, %s107
      %s109 = sphi 0, %s107
      %s110 = sphi 0, %s109
      %s124 = sphi 0, %s110
      %s128 = sphi 0, %s128
      %s130 = sphi 0, %s128
      %s131 = sphi 0, %s130
      %s145 = sphi 0, %s131
      %s149 = sphi 0, %s149
      %s151 = sphi 0, %s149
      %s152 = sphi 0, %s151
      %s166 = sphi 0, %s152
      %s170 = sphi 0, %s170
      %s172 = sphi 0, %s170
      %s173 = sphi 0, %s172
      %s187 = sphi 0, %s173
      %s191 = sphi 0, %s191
      %s193 = sphi 0, %s191
      %s194 = sphi 0, %s193
      %s208 = sphi 0, %s194
      %s212 = sphi 0, %s212
      %s214 = sphi 0, %s212
      %s215 = sphi 0, %s214
      %s229 = sphi 0, %s215
      %s233 = sphi 0, %s233
      %s235 = sphi 0, %s233
      %s236 = sphi 0, %s235
      %s250 = sphi 0, %s236
      %s254 = sphi 0, %s254
      %s256 = sphi 0, %s254
      %s257 = sphi 0, %s256
      %s271 = sphi 0, %s257
      %s275 = sphi 0, %s275
      %s277 = sphi 0, %s275
      %s278 = sphi 0, %s277
      %s292 = sphi 0, %s278
      %s296 = sphi 0, %s296
      %s298 = sphi 0, %s296
      %s299 = sphi 0, %s298
      %s313 = sphi 0, %s299
      %s319 = sphi 0, %s321
      %s322 = sphi 0, %s319
      %s323 = sphi 0, %s322
      %s339 = sphi 0, %s323
    $region4: #{tpu_custom_call.1} parent=1 // loop_header_branch
      %34 = sbr.rel (%p32) target = $region8
    $region5: #{tpu_custom_call.1} parent=1 // loop_body
      %s36 = ssub.s32 %s31, 1
      %s37 = ssub.s32 %s31, 2
      %s38 = sadd.s32 %s31, 1
      %s39 = ssub.s32 %s31, %s38
      %p40 = scmp.eq.s32.totalorder %s39, 0
      %s42 = sadd.s32 %s41, 1
      %s43 = scalar_select %p40, %s41, %s42
      %p46 = pneg %p40
      %p47 = scmp.eq.s32.totalorder %s31, 1
      %p48 = por %p46, %p47
      %p49 = scmp.ne.s32.totalorder %s41, %s44
      %p50 = scmp.eq.s32.totalorder %s31, 0
      %p51 = por %p49, %p50
      %p52 = scmp.ne.s32.totalorder %s41, %s44
      %p53 = scmp.eq.s32.totalorder %s36, 1
      %p54 = por %p52, %p53
      %p55 = scmp.ne.s32.totalorder %s44, %s45
      %p56 = scmp.eq.s32.totalorder %s36, 0
      %p57 = por %p55, %p56
      %p58 = scmp.ne.s32.totalorder %s44, %s45
      %p59 = scmp.eq.s32.totalorder %s37, 1
      %p60 = por %p58, %p59
      %p62 = scmp.ne.s32.totalorder %s45, %s61
      %p63 = scmp.eq.s32.totalorder %s37, 0
      %p64 = por %p62, %p63
      %s66 = sadd.s32 %s65, 1
      %p69 = scmp.eq.s32.totalorder %s31, 1
      %p70 = scmp.ne.s32.totalorder %s65, %s67
      %p71 = scmp.eq.s32.totalorder %s31, 0
      %p72 = por %p70, %p71
      %p73 = scmp.ne.s32.totalorder %s65, %s67
      %p74 = scmp.eq.s32.totalorder %s36, 1
      %p75 = por %p73, %p74
      %p76 = scmp.ne.s32.totalorder %s67, %s68
      %p77 = scmp.eq.s32.totalorder %s36, 0
      %p78 = por %p76, %p77
      %p79 = scmp.ne.s32.totalorder %s67, %s68
      %p80 = scmp.eq.s32.totalorder %s37, 1
      %p81 = por %p79, %p80
      %p83 = scmp.ne.s32.totalorder %s68, %s82
      %p84 = scmp.eq.s32.totalorder %s37, 0
      %p85 = por %p83, %p84
      %s87 = sadd.s32 %s86, 1
      %p90 = scmp.eq.s32.totalorder %s31, 1
      %p91 = scmp.ne.s32.totalorder %s86, %s88
      %p92 = scmp.eq.s32.totalorder %s31, 0
      %p93 = por %p91, %p92
      %p94 = scmp.ne.s32.totalorder %s86, %s88
      %p95 = scmp.eq.s32.totalorder %s36, 1
      %p96 = por %p94, %p95
      %p97 = scmp.ne.s32.totalorder %s88, %s89
      %p98 = scmp.eq.s32.totalorder %s36, 0
      %p99 = por %p97, %p98
      %p100 = scmp.ne.s32.totalorder %s88, %s89
      %p101 = scmp.eq.s32.totalorder %s37, 1
      %p102 = por %p100, %p101
      %p104 = scmp.ne.s32.totalorder %s89, %s103
      %p105 = scmp.eq.s32.totalorder %s37, 0
      %p106 = por %p104, %p105
      %s108 = sadd.s32 %s107, 1
      %p111 = scmp.eq.s32.totalorder %s31, 1
      %p112 = scmp.ne.s32.totalorder %s107, %s109
      %p113 = scmp.eq.s32.totalorder %s31, 0
      %p114 = por %p112, %p113
      %p115 = scmp.ne.s32.totalorder %s107, %s109
      %p116 = scmp.eq.s32.totalorder %s36, 1
      %p117 = por %p115, %p116
      %p118 = scmp.ne.s32.totalorder %s109, %s110
      %p119 = scmp.eq.s32.totalorder %s36, 0
      %p120 = por %p118, %p119
      %p121 = scmp.ne.s32.totalorder %s109, %s110
      %p122 = scmp.eq.s32.totalorder %s37, 1
      %p123 = por %p121, %p122
      %p125 = scmp.ne.s32.totalorder %s110, %s124
      %p126 = scmp.eq.s32.totalorder %s37, 0
      %p127 = por %p125, %p126
      %s129 = sadd.s32 %s128, 1
      %p132 = scmp.eq.s32.totalorder %s31, 1
      %p133 = scmp.ne.s32.totalorder %s128, %s130
      %p134 = scmp.eq.s32.totalorder %s31, 0
      %p135 = por %p133, %p134
      %p136 = scmp.ne.s32.totalorder %s128, %s130
      %p137 = scmp.eq.s32.totalorder %s36, 1
      %p138 = por %p136, %p137
      %p139 = scmp.ne.s32.totalorder %s130, %s131
      %p140 = scmp.eq.s32.totalorder %s36, 0
      %p141 = por %p139, %p140
      %p142 = scmp.ne.s32.totalorder %s130, %s131
      %p143 = scmp.eq.s32.totalorder %s37, 1
      %p144 = por %p142, %p143
      %p146 = scmp.ne.s32.totalorder %s131, %s145
      %p147 = scmp.eq.s32.totalorder %s37, 0
      %p148 = por %p146, %p147
      %s150 = sadd.s32 %s149, 1
      %p153 = scmp.eq.s32.totalorder %s31, 1
      %p154 = scmp.ne.s32.totalorder %s149, %s151
      %p155 = scmp.eq.s32.totalorder %s31, 0
      %p156 = por %p154, %p155
      %p157 = scmp.ne.s32.totalorder %s149, %s151
      %p158 = scmp.eq.s32.totalorder %s36, 1
      %p159 = por %p157, %p158
      %p160 = scmp.ne.s32.totalorder %s151, %s152
      %p161 = scmp.eq.s32.totalorder %s36, 0
      %p162 = por %p160, %p161
      %p163 = scmp.ne.s32.totalorder %s151, %s152
      %p164 = scmp.eq.s32.totalorder %s37, 1
      %p165 = por %p163, %p164
      %p167 = scmp.ne.s32.totalorder %s152, %s166
      %p168 = scmp.eq.s32.totalorder %s37, 0
      %p169 = por %p167, %p168
      %s171 = sadd.s32 %s170, 1
      %p174 = scmp.eq.s32.totalorder %s31, 1
      %p175 = scmp.ne.s32.totalorder %s170, %s172
      %p176 = scmp.eq.s32.totalorder %s31, 0
      %p177 = por %p175, %p176
      %p178 = scmp.ne.s32.totalorder %s170, %s172
      %p179 = scmp.eq.s32.totalorder %s36, 1
      %p180 = por %p178, %p179
      %p181 = scmp.ne.s32.totalorder %s172, %s173
      %p182 = scmp.eq.s32.totalorder %s36, 0
      %p183 = por %p181, %p182
      %p184 = scmp.ne.s32.totalorder %s172, %s173
      %p185 = scmp.eq.s32.totalorder %s37, 1
      %p186 = por %p184, %p185
      %p188 = scmp.ne.s32.totalorder %s173, %s187
      %p189 = scmp.eq.s32.totalorder %s37, 0
      %p190 = por %p188, %p189
      %s192 = sadd.s32 %s191, 1
      %p195 = scmp.eq.s32.totalorder %s31, 1
      %p196 = scmp.ne.s32.totalorder %s191, %s193
      %p197 = scmp.eq.s32.totalorder %s31, 0
      %p198 = por %p196, %p197
      %p199 = scmp.ne.s32.totalorder %s191, %s193
      %p200 = scmp.eq.s32.totalorder %s36, 1
      %p201 = por %p199, %p200
      %p202 = scmp.ne.s32.totalorder %s193, %s194
      %p203 = scmp.eq.s32.totalorder %s36, 0
      %p204 = por %p202, %p203
      %p205 = scmp.ne.s32.totalorder %s193, %s194
      %p206 = scmp.eq.s32.totalorder %s37, 1
      %p207 = por %p205, %p206
      %p209 = scmp.ne.s32.totalorder %s194, %s208
      %p210 = scmp.eq.s32.totalorder %s37, 0
      %p211 = por %p209, %p210
      %s213 = sadd.s32 %s212, 1
      %p216 = scmp.eq.s32.totalorder %s31, 1
      %p217 = scmp.ne.s32.totalorder %s212, %s214
      %p218 = scmp.eq.s32.totalorder %s31, 0
      %p219 = por %p217, %p218
      %p220 = scmp.ne.s32.totalorder %s212, %s214
      %p221 = scmp.eq.s32.totalorder %s36, 1
      %p222 = por %p220, %p221
      %p223 = scmp.ne.s32.totalorder %s214, %s215
      %p224 = scmp.eq.s32.totalorder %s36, 0
      %p225 = por %p223, %p224
      %p226 = scmp.ne.s32.totalorder %s214, %s215
      %p227 = scmp.eq.s32.totalorder %s37, 1
      %p228 = por %p226, %p227
      %p230 = scmp.ne.s32.totalorder %s215, %s229
      %p231 = scmp.eq.s32.totalorder %s37, 0
      %p232 = por %p230, %p231
      %s234 = sadd.s32 %s233, 1
      %p237 = scmp.eq.s32.totalorder %s31, 1
      %p238 = scmp.ne.s32.totalorder %s233, %s235
      %p239 = scmp.eq.s32.totalorder %s31, 0
      %p240 = por %p238, %p239
      %p241 = scmp.ne.s32.totalorder %s233, %s235
      %p242 = scmp.eq.s32.totalorder %s36, 1
      %p243 = por %p241, %p242
      %p244 = scmp.ne.s32.totalorder %s235, %s236
      %p245 = scmp.eq.s32.totalorder %s36, 0
      %p246 = por %p244, %p245
      %p247 = scmp.ne.s32.totalorder %s235, %s236
      %p248 = scmp.eq.s32.totalorder %s37, 1
      %p249 = por %p247, %p248
      %p251 = scmp.ne.s32.totalorder %s236, %s250
      %p252 = scmp.eq.s32.totalorder %s37, 0
      %p253 = por %p251, %p252
      %s255 = sadd.s32 %s254, 1
      %p258 = scmp.eq.s32.totalorder %s31, 1
      %p259 = scmp.ne.s32.totalorder %s254, %s256
      %p260 = scmp.eq.s32.totalorder %s31, 0
      %p261 = por %p259, %p260
      %p262 = scmp.ne.s32.totalorder %s254, %s256
      %p263 = scmp.eq.s32.totalorder %s36, 1
      %p264 = por %p262, %p263
      %p265 = scmp.ne.s32.totalorder %s256, %s257
      %p266 = scmp.eq.s32.totalorder %s36, 0
      %p267 = por %p265, %p266
      %p268 = scmp.ne.s32.totalorder %s256, %s257
      %p269 = scmp.eq.s32.totalorder %s37, 1
      %p270 = por %p268, %p269
      %p272 = scmp.ne.s32.totalorder %s257, %s271
      %p273 = scmp.eq.s32.totalorder %s37, 0
      %p274 = por %p272, %p273
      %s276 = sadd.s32 %s275, 1
      %p279 = scmp.eq.s32.totalorder %s31, 1
      %p280 = scmp.ne.s32.totalorder %s275, %s277
      %p281 = scmp.eq.s32.totalorder %s31, 0
      %p282 = por %p280, %p281
      %p283 = scmp.ne.s32.totalorder %s275, %s277
      %p284 = scmp.eq.s32.totalorder %s36, 1
      %p285 = por %p283, %p284
      %p286 = scmp.ne.s32.totalorder %s277, %s278
      %p287 = scmp.eq.s32.totalorder %s36, 0
      %p288 = por %p286, %p287
      %p289 = scmp.ne.s32.totalorder %s277, %s278
      %p290 = scmp.eq.s32.totalorder %s37, 1
      %p291 = por %p289, %p290
      %p293 = scmp.ne.s32.totalorder %s278, %s292
      %p294 = scmp.eq.s32.totalorder %s37, 0
      %p295 = por %p293, %p294
      %s297 = sadd.s32 %s296, 1
      %p300 = scmp.eq.s32.totalorder %s31, 1
      %p301 = scmp.ne.s32.totalorder %s296, %s298
      %p302 = scmp.eq.s32.totalorder %s31, 0
      %p303 = por %p301, %p302
      %p304 = scmp.ne.s32.totalorder %s296, %s298
      %p305 = scmp.eq.s32.totalorder %s36, 1
      %p306 = por %p304, %p305
      %p307 = scmp.ne.s32.totalorder %s298, %s299
      %p308 = scmp.eq.s32.totalorder %s36, 0
      %p309 = por %p307, %p308
      %p310 = scmp.ne.s32.totalorder %s298, %s299
      %p311 = scmp.eq.s32.totalorder %s37, 1
      %p312 = por %p310, %p311
      %p314 = scmp.ne.s32.totalorder %s299, %s313
      %p315 = scmp.eq.s32.totalorder %s37, 0
      %p316 = por %p314, %p315
      %s317 = ssub.s32 %s31, %s38
      %p318 = scmp.eq.s32.totalorder %s317, 0
      %s320 = sadd.s32 %s319, 1
      %s321 = scalar_select %p318, %s319, %s320
      %p324 = pneg %p318
      %p325 = scmp.eq.s32.totalorder %s31, 1
      %p326 = por %p324, %p325
      %p327 = scmp.ne.s32.totalorder %s319, %s322
      %p328 = scmp.eq.s32.totalorder %s31, 0
      %p329 = por %p327, %p328
      %p330 = scmp.ne.s32.totalorder %s319, %s322
      %p331 = scmp.eq.s32.totalorder %s36, 1
      %p332 = por %p330, %p331
      %p333 = scmp.ne.s32.totalorder %s322, %s323
      %p334 = scmp.eq.s32.totalorder %s36, 0
      %p335 = por %p333, %p334
      %p336 = scmp.ne.s32.totalorder %s322, %s323
      %p337 = scmp.eq.s32.totalorder %s37, 1
      %p338 = por %p336, %p337
      %p340 = scmp.ne.s32.totalorder %s323, %s339
      %p341 = scmp.eq.s32.totalorder %s37, 0
      %p342 = por %p340, %p341
      %p343 = scmp.le.s32.totalorder 1, %s31
      %p344 = scmp.lt.s32.totalorder %s31, 3
      %p345 = pnand %p343, %p344
      %p346 = pneg %p345
      // Predicated region
      $region9: #{tpu_custom_call.1} parent=5 // pred_check
        _
      $region10: #{tpu_custom_call.1} parent=5 // pred_check_branch
        %348 = sbr.rel (%p345) target = $region12
      $region11: #{tpu_custom_call.1} parent=5 // pred_region
        %s349 = ssub.s32 %s31, 1
        // Predicated region
        $region13: #{tpu_custom_call.1} parent=11 // pred_check
          %p350 = pneg %p78
        $region14: #{tpu_custom_call.1} parent=11 // pred_check_branch
          %352 = sbr.rel (%p350) target = $region16
        $region15: #{tpu_custom_call.1} parent=11 // pred_region
          %s354 = ssub.s32 16, 16
          %355 = vsyncadd [#allocation6], %s354
          %s357 = sshll.u32 [#allocation5], 4
          %s358 = int_to_ptr.vmem [resolvable:$true] %s357
          %360 = dma.hbm_to_vmem [thread:$0]  %s1, 16, %s358, [#allocation6]
        $region16: #{tpu_custom_call.1} parent=11 // pred_fallthru
          _
        // Predicated region
        $region17: #{tpu_custom_call.1} parent=11 // pred_check
          %p361 = pneg %p99
        $region18: #{tpu_custom_call.1} parent=11 // pred_check_branch
          %363 = sbr.rel (%p361) target = $region20
        $region19: #{tpu_custom_call.1} parent=11 // pred_region
          %s365 = ssub.s32 16, 16
          %366 = vsyncadd [#allocation6], %s365
          %s368 = sshll.u32 [#allocation7], 4
          %s369 = int_to_ptr.vmem [resolvable:$true] %s368
          %371 = dma.hbm_to_vmem [thread:$0]  %s2, 16, %s369, [#allocation6]
        $region20: #{tpu_custom_call.1} parent=11 // pred_fallthru
          _
        // Predicated region
        $region21: #{tpu_custom_call.1} parent=11 // pred_check
          %p372 = pneg %p120
        $region22: #{tpu_custom_call.1} parent=11 // pred_check_branch
          %374 = sbr.rel (%p372) target = $region24
        $region23: #{tpu_custom_call.1} parent=11 // pred_region
          %s376 = ssub.s32 256, 256
          %377 = vsyncadd [#allocation9], %s376
          %s378 = sshll.u32 [#allocation8], 4
          %s379 = int_to_ptr.vmem [resolvable:$true] %s378
          %384 = dma.hbm_to_vmem [thread:$0]  %s3, 256, %s379, [#allocation9], 64, 64, 4
        $region24: #{tpu_custom_call.1} parent=11 // pred_fallthru
          _
        // Predicated region
        $region25: #{tpu_custom_call.1} parent=11 // pred_check
          %p385 = pneg %p141
        $region26: #{tpu_custom_call.1} parent=11 // pred_check_branch
          %387 = sbr.rel (%p385) target = $region28
        $region27: #{tpu_custom_call.1} parent=11 // pred_region
          %s389 = ssub.s32 16, 16
          %390 = vsyncadd [#allocation9], %s389
          %s392 = sshll.u32 [#allocation10], 4
          %s393 = int_to_ptr.vmem [resolvable:$true] %s392
          %395 = dma.hbm_to_vmem [thread:$0]  %s4, 16, %s393, [#allocation9]
        $region28: #{tpu_custom_call.1} parent=11 // pred_fallthru
          _
        // Predicated region
        $region29: #{tpu_custom_call.1} parent=11 // pred_check
          %p396 = pneg %p162
        $region30: #{tpu_custom_call.1} parent=11 // pred_check_branch
          %398 = sbr.rel (%p396) target = $region32
        $region31: #{tpu_custom_call.1} parent=11 // pred_region
          %s400 = ssub.s32 256, 256
          %401 = vsyncadd [#allocation12], %s400
          %s402 = sshll.u32 [#allocation11], 4
          %s403 = int_to_ptr.vmem [resolvable:$true] %s402
          %408 = dma.hbm_to_vmem [thread:$0]  %s5, 256, %s403, [#allocation12], 64, 64, 4
        $region32: #{tpu_custom_call.1} parent=11 // pred_fallthru
          _
        // Predicated region
        $region33: #{tpu_custom_call.1} parent=11 // pred_check
          %p409 = pneg %p183
        $region34: #{tpu_custom_call.1} parent=11 // pred_check_branch
          %411 = sbr.rel (%p409) target = $region36
        $region35: #{tpu_custom_call.1} parent=11 // pred_region
          %s413 = ssub.s32 16, 16
          %414 = vsyncadd [#allocation12], %s413
          %s416 = sshll.u32 [#allocation13], 4
          %s417 = int_to_ptr.vmem [resolvable:$true] %s416
          %419 = dma.hbm_to_vmem [thread:$0]  %s6, 16, %s417, [#allocation12]
        $region36: #{tpu_custom_call.1} parent=11 // pred_fallthru
          _
        // Predicated region
        $region37: #{tpu_custom_call.1} parent=11 // pred_check
          %p420 = pneg %p204
        $region38: #{tpu_custom_call.1} parent=11 // pred_check_branch
          %422 = sbr.rel (%p420) target = $region40
        $region39: #{tpu_custom_call.1} parent=11 // pred_region
          %s424 = ssub.s32 16, 16
          %425 = vsyncadd [#allocation15], %s424
          %s427 = sshll.u32 [#allocation14], 4
          %s428 = int_to_ptr.vmem [resolvable:$true] %s427
          %430 = dma.hbm_to_vmem [thread:$0]  %s7, 16, %s428, [#allocation15]
        $region40: #{tpu_custom_call.1} parent=11 // pred_fallthru
          _
        // Predicated region
        $region41: #{tpu_custom_call.1} parent=11 // pred_check
          %p431 = pneg %p225
        $region42: #{tpu_custom_call.1} parent=11 // pred_check_branch
          %433 = sbr.rel (%p431) target = $region44
        $region43: #{tpu_custom_call.1} parent=11 // pred_region
          %s435 = ssub.s32 16, 16
          %436 = vsyncadd [#allocation15], %s435
          %s438 = sshll.u32 [#allocation16], 4
          %s439 = int_to_ptr.vmem [resolvable:$true] %s438
          %441 = dma.hbm_to_vmem [thread:$0]  %s8, 16, %s439, [#allocation15]
        $region44: #{tpu_custom_call.1} parent=11 // pred_fallthru
          _
        // Predicated region
        $region45: #{tpu_custom_call.1} parent=11 // pred_check
          %p442 = pneg %p246
        $region46: #{tpu_custom_call.1} parent=11 // pred_check_branch
          %444 = sbr.rel (%p442) target = $region48
        $region47: #{tpu_custom_call.1} parent=11 // pred_region
          %s446 = ssub.s32 256, 256
          %447 = vsyncadd [#allocation18], %s446
          %s448 = sshll.u32 [#allocation17], 4
          %s449 = int_to_ptr.vmem [resolvable:$true] %s448
          %454 = dma.hbm_to_vmem [thread:$0]  %s9, 256, %s449, [#allocation18], 64, 64, 4
        $region48: #{tpu_custom_call.1} parent=11 // pred_fallthru
          _
        // Predicated region
        $region49: #{tpu_custom_call.1} parent=11 // pred_check
          %p455 = pneg %p267
        $region50: #{tpu_custom_call.1} parent=11 // pred_check_branch
          %457 = sbr.rel (%p455) target = $region52
        $region51: #{tpu_custom_call.1} parent=11 // pred_region
          %s459 = ssub.s32 16, 16
          %460 = vsyncadd [#allocation18], %s459
          %s462 = sshll.u32 [#allocation19], 4
          %s463 = int_to_ptr.vmem [resolvable:$true] %s462
          %465 = dma.hbm_to_vmem [thread:$0]  %s10, 16, %s463, [#allocation18]
        $region52: #{tpu_custom_call.1} parent=11 // pred_fallthru
          _
        // Predicated region
        $region53: #{tpu_custom_call.1} parent=11 // pred_check
          %p466 = pneg %p288
        $region54: #{tpu_custom_call.1} parent=11 // pred_check_branch
          %468 = sbr.rel (%p466) target = $region56
        $region55: #{tpu_custom_call.1} parent=11 // pred_region
          %s470 = ssub.s32 1024, 1024
          %471 = vsyncadd [#allocation21], %s470
          %s472 = sshll.u32 [#allocation20], 4
          %s473 = int_to_ptr.vmem [resolvable:$true] %s472
          %478 = dma.hbm_to_vmem [thread:$0]  %s11, 1024, %s473, [#allocation21], 64, 64, 4
        $region56: #{tpu_custom_call.1} parent=11 // pred_fallthru
          _
        // Predicated region
        $region57: #{tpu_custom_call.1} parent=11 // pred_check
          %p479 = pneg %p309
        $region58: #{tpu_custom_call.1} parent=11 // pred_check_branch
          %481 = sbr.rel (%p479) target = $region60
        $region59: #{tpu_custom_call.1} parent=11 // pred_region
          %s483 = ssub.s32 16, 16
          %484 = vsyncadd [#allocation21], %s483
          %s486 = sshll.u32 [#allocation22], 4
          %s487 = int_to_ptr.vmem [resolvable:$true] %s486
          %489 = dma.hbm_to_vmem [thread:$0]  %s12, 16, %s487, [#allocation21]
        $region60: #{tpu_custom_call.1} parent=11 // pred_fallthru
          _
      $region12: #{tpu_custom_call.1} parent=5 // pred_fallthru
        _
      %p490 = scmp.lt.s32.totalorder %s31, 2
      // Predicated region
      $region61: #{tpu_custom_call.1} parent=5 // pred_check
        %p491 = pneg %p490
      $region62: #{tpu_custom_call.1} parent=5 // pred_check_branch
        %493 = sbr.rel (%p491) target = $region64
      $region63: #{tpu_custom_call.1} parent=5 // pred_region
        // Predicated region
        $region65: #{tpu_custom_call.1} parent=63 // pred_check
          %p494 = pneg %p51
        $region66: #{tpu_custom_call.1} parent=63 // pred_check_branch
          %496 = sbr.rel (%p494) target = $region68
        $region67: #{tpu_custom_call.1} parent=63 // pred_region
          %s497 = sand.u32 %s41, 1
          %s498 = scalar_lea.sflag [#allocation3], %s497
          %s499 = sand.u32 %s41, 1
          %s500 = smul.addr %s499, 8
          %s501 = scalar_lea.vmem [#allocation2], %s500
          %s503 = ssub.s32 128, 128
          %504 = vsyncadd %s498, %s503
          %s505 = smul.addr %s31, 128
          %s506 = scalar_lea.hbm %s0, %s505
          %s508 = sshll.u32 %s501, 4
          %s509 = int_to_ptr.vmem [resolvable:$true] %s508
          %511 = dma.hbm_to_vmem [thread:$0]  %s506, 128, %s509, %s498
        $region68: #{tpu_custom_call.1} parent=63 // pred_fallthru
          _
      $region64: #{tpu_custom_call.1} parent=5 // pred_fallthru
        _
      %p512 = scmp.le.s32.totalorder 1, %s31
      %p513 = scmp.lt.s32.totalorder %s31, 3
      %p514 = pnand %p512, %p513
      %p515 = pneg %p514
      // Predicated region
      $region69: #{tpu_custom_call.1} parent=5 // pred_check
        _
      $region70: #{tpu_custom_call.1} parent=5 // pred_check_branch
        %517 = sbr.rel (%p514) target = $region72
      $region71: #{tpu_custom_call.1} parent=5 // pred_region
        %s518 = ssub.s32 %s31, 1
        %s519 = sand.u32 %s44, 1
        %s520 = scalar_lea.sflag [#allocation3], %s519
        %s521 = sand.u32 %s44, 1
        %s522 = smul.addr %s521, 8
        %s523 = scalar_lea.vmem [#allocation2], %s522
        // Predicated region
        $region73: #{tpu_custom_call.1} parent=71 // pred_check
          %p524 = pneg %p57
        $region74: #{tpu_custom_call.1} parent=71 // pred_check_branch
          %526 = sbr.rel (%p524) target = $region76
        $region75: #{tpu_custom_call.1} parent=71 // pred_region
          %527 = dma.done %s520, 128
        $region76: #{tpu_custom_call.1} parent=71 // pred_fallthru
          _
        // Predicated region
        $region77: #{tpu_custom_call.1} parent=71 // pred_check
          %p528 = pneg %p78
        $region78: #{tpu_custom_call.1} parent=71 // pred_check_branch
          %530 = sbr.rel (%p528) target = $region80
        $region79: #{tpu_custom_call.1} parent=71 // pred_region
          %531 = dma.done [#allocation6], 16
        $region80: #{tpu_custom_call.1} parent=71 // pred_fallthru
          _
        // Predicated region
        $region81: #{tpu_custom_call.1} parent=71 // pred_check
          %p532 = pneg %p99
        $region82: #{tpu_custom_call.1} parent=71 // pred_check_branch
          %534 = sbr.rel (%p532) target = $region84
        $region83: #{tpu_custom_call.1} parent=71 // pred_region
          %535 = dma.done [#allocation6], 16
        $region84: #{tpu_custom_call.1} parent=71 // pred_fallthru
          _
        // Predicated region
        $region85: #{tpu_custom_call.1} parent=71 // pred_check
          %p536 = pneg %p120
        $region86: #{tpu_custom_call.1} parent=71 // pred_check_branch
          %538 = sbr.rel (%p536) target = $region88
        $region87: #{tpu_custom_call.1} parent=71 // pred_region
          %539 = dma.done [#allocation9], 256
        $region88: #{tpu_custom_call.1} parent=71 // pred_fallthru
          _
        // Predicated region
        $region89: #{tpu_custom_call.1} parent=71 // pred_check
          %p540 = pneg %p141
        $region90: #{tpu_custom_call.1} parent=71 // pred_check_branch
          %542 = sbr.rel (%p540) target = $region92
        $region91: #{tpu_custom_call.1} parent=71 // pred_region
          %543 = dma.done [#allocation9], 16
        $region92: #{tpu_custom_call.1} parent=71 // pred_fallthru
          _
        // Predicated region
        $region93: #{tpu_custom_call.1} parent=71 // pred_check
          %p544 = pneg %p162
        $region94: #{tpu_custom_call.1} parent=71 // pred_check_branch
          %546 = sbr.rel (%p544) target = $region96
        $region95: #{tpu_custom_call.1} parent=71 // pred_region
          %547 = dma.done [#allocation12], 256
        $region96: #{tpu_custom_call.1} parent=71 // pred_fallthru
          _
        // Predicated region
        $region97: #{tpu_custom_call.1} parent=71 // pred_check
          %p548 = pneg %p183
        $region98: #{tpu_custom_call.1} parent=71 // pred_check_branch
          %550 = sbr.rel (%p548) target = $region100
        $region99: #{tpu_custom_call.1} parent=71 // pred_region
          %551 = dma.done [#allocation12], 16
        $region100: #{tpu_custom_call.1} parent=71 // pred_fallthru
          _
        // Predicated region
        $region101: #{tpu_custom_call.1} parent=71 // pred_check
          %p552 = pneg %p204
        $region102: #{tpu_custom_call.1} parent=71 // pred_check_branch
          %554 = sbr.rel (%p552) target = $region104
        $region103: #{tpu_custom_call.1} parent=71 // pred_region
          %555 = dma.done [#allocation15], 16
        $region104: #{tpu_custom_call.1} parent=71 // pred_fallthru
          _
        // Predicated region
        $region105: #{tpu_custom_call.1} parent=71 // pred_check
          %p556 = pneg %p225
        $region106: #{tpu_custom_call.1} parent=71 // pred_check_branch
          %558 = sbr.rel (%p556) target = $region108
        $region107: #{tpu_custom_call.1} parent=71 // pred_region
          %559 = dma.done [#allocation15], 16
        $region108: #{tpu_custom_call.1} parent=71 // pred_fallthru
          _
        // Predicated region
        $region109: #{tpu_custom_call.1} parent=71 // pred_check
          %p560 = pneg %p246
        $region110: #{tpu_custom_call.1} parent=71 // pred_check_branch
          %562 = sbr.rel (%p560) target = $region112
        $region111: #{tpu_custom_call.1} parent=71 // pred_region
          %563 = dma.done [#allocation18], 256
        $region112: #{tpu_custom_call.1} parent=71 // pred_fallthru
          _
        // Predicated region
        $region113: #{tpu_custom_call.1} parent=71 // pred_check
          %p564 = pneg %p267
        $region114: #{tpu_custom_call.1} parent=71 // pred_check_branch
          %566 = sbr.rel (%p564) target = $region116
        $region115: #{tpu_custom_call.1} parent=71 // pred_region
          %567 = dma.done [#allocation18], 16
        $region116: #{tpu_custom_call.1} parent=71 // pred_fallthru
          _
        // Predicated region
        $region117: #{tpu_custom_call.1} parent=71 // pred_check
          %p568 = pneg %p288
        $region118: #{tpu_custom_call.1} parent=71 // pred_check_branch
          %570 = sbr.rel (%p568) target = $region120
        $region119: #{tpu_custom_call.1} parent=71 // pred_region
          %571 = dma.done [#allocation21], 1024
        $region120: #{tpu_custom_call.1} parent=71 // pred_fallthru
          _
        // Predicated region
        $region121: #{tpu_custom_call.1} parent=71 // pred_check
          %p572 = pneg %p309
        $region122: #{tpu_custom_call.1} parent=71 // pred_check_branch
          %574 = sbr.rel (%p572) target = $region124
        $region123: #{tpu_custom_call.1} parent=71 // pred_region
          %575 = dma.done [#allocation21], 16
        $region124: #{tpu_custom_call.1} parent=71 // pred_fallthru
          _
        %s576 = sand.u32 %s44, 1
        %s577 = scalar_lea.sflag [#allocation3], %s576
        %s578 = sand.u32 %s44, 1
        %s579 = smul.addr %s578, 8
        %s580 = scalar_lea.vmem [#allocation2], %s579
        %p581 = pneg %p57
        %p582 = pneg %p54
        %p583 = pneg %p78
        %p584 = pneg %p75
        %p585 = pneg %p99
        %p586 = pneg %p96
        %p587 = pneg %p120
        %p588 = pneg %p117
        %p589 = pneg %p141
        %p590 = pneg %p138
        %p591 = pneg %p162
        %p592 = pneg %p159
        %p593 = pneg %p183
        %p594 = pneg %p180
        %p595 = pneg %p204
        %p596 = pneg %p201
        %p597 = pneg %p225
        %p598 = pneg %p222
        %p599 = pneg %p246
        %p600 = pneg %p243
        %p601 = pneg %p267
        %p602 = pneg %p264
        %p603 = pneg %p288
        %p604 = pneg %p285
        %p605 = pneg %p309
        %p606 = pneg %p306
        %p607 = pneg %p335
        %p608 = pneg %p332
        %s609 = sand.u32 %s322, 1
        %s610 = scalar_lea.sflag [#allocation4], %s609
        %s611 = sand.u32 %s322, 1
        %s612 = smul.addr %s611, 8
        %s613 = scalar_lea.vmem [#allocation23], %s612
        %v615 = vld [vmem:[%s523] sm:$0xff]
        %v616 = vld [vmem:[#allocation5] sm:$0x1]
        %v617 = vld [vmem:[#allocation7] sm:$0x1]
        %vm618 = vcmask 261120
        %v619 = vsel %vm618, %v615, 0.0
        %620 = vadd.xlane.f32.xlu0 %v619
        %v621 = vpop.xlane.xlu0 %620
        %v622 = vrcp.pop 32.0
        %v623 = vmul.f32 %v621, %v622
        %v624 = vsub.f32 %v615, %v623
        %v625 = vmul.f32 %v624, %v624
        %v626 = vsel %vm618, %v625, 0.0
        %627 = vadd.xlane.f32.xlu0 %v626
        %v628 = vpop.xlane.xlu0 %627
        %v629 = vmul.f32 %v628, %v622
        %v630 = vadd.f32 %v629, 1e-05
        %v631 = vrsqrt.pop %v630
        %v632 = vmul.f32 %v624, %v631
        %v634 = vlaneseq
        %v635 = vshrl.u32 %v634, 7
        %v636 = vsub.s32 0, %v635
        %v637 = vrot.slane %v616, %v636
        %v639 = vmul.f32 %v632, %v637
        %v641 = vlaneseq
        %v642 = vshrl.u32 %v641, 7
        %v643 = vsub.s32 0, %v642
        %v644 = vrot.slane %v617, %v643
        %v646 = vadd.f32 %v639, %v644
        %v647 = vpack.c.bf16 %v646, %v646
        %v648 = vld [vmem:[#allocation8] sm:$0xf]
        %v649 = vld [vmem:[#allocation8 + $0x4] sm:$0xf]
        %v650 = vld [vmem:[#allocation8 + $0x8] sm:$0xf]
        %v651 = vld [vmem:[#allocation8 + $0xc] sm:$0xf]
        %v652 = vld [vmem:[#allocation10] sm:$0x1]
        %v654 = vlaneseq
        %v655 = vshrl.u32 %v654, 7
        %v656 = vsub.s32 0, %v655
        %v657 = vrot.slane %v652, %v656
        %v663 = vunpack.c.l.b16 %v648
        %v664 = vunpack.c.l.b16 %v649
        %v665 = vunpack.c.l.b16 %v650
        %v666 = vunpack.c.l.b16 %v651
        %v667 = vpack.c.b16 %v664, %v663
        %v668 = vpack.c.b16 %v666, %v665
        %v672 = vsel %vm618, %v647, 0
        %674 = vmatprep.subr.bf16.mxu0 0
        %675 = vmatpush1.bf16.msra.mxu0 %v667
        %676 = vmatprep.subr.bf16.mxu0 0
        %677 = vmatpush1.bf16.msra.mxu0 %v668
        %678 = vmatprep.subr.bf16.mxu0 0
        %679 = vmatpush1.bf16.msra.mxu0 0
        %680 = vmatprep.subr.bf16.mxu0 0
        %681 = vmatpush1.bf16.msra.mxu0 0
        %682 = vmatprep.subr.bf16.mxu0 0
        %683 = vmatpush1.bf16.msra.mxu0 0
        %684 = vmatprep.subr.bf16.mxu0 0
        %685 = vmatpush1.bf16.msra.mxu0 0
        %686 = vmatprep.subr.bf16.mxu0 0
        %687 = vmatpush1.bf16.msra.mxu0 0
        %688 = vmatprep.subr.bf16.mxu0 0
        %689 = vmatpush1.bf16.msra.mxu0 0
        %690 = vmatprep.subr.bf16.mxu0 0
        %691 = vmatpush1.bf16.msra.mxu0 0
        %692 = vmatprep.subr.bf16.mxu0 0
        %693 = vmatpush1.bf16.msra.mxu0 0
        %694 = vmatprep.subr.bf16.mxu0 0
        %695 = vmatpush1.bf16.msra.mxu0 0
        %696 = vmatprep.subr.bf16.mxu0 0
        %697 = vmatpush1.bf16.msra.mxu0 0
        %698 = vmatprep.subr.bf16.mxu0 0
        %699 = vmatpush1.bf16.msra.mxu0 0
        %700 = vmatprep.subr.bf16.mxu0 0
        %701 = vmatpush1.bf16.msra.mxu0 0
        %702 = vmatprep.subr.bf16.mxu0 0
        %703 = vmatpush1.bf16.msra.mxu0 0
        %704 = vmatprep.subr.bf16.mxu0 0
        %705 = vmatpush1.bf16.msra.mxu0 0
        %706 = vmatprep.mubr.bf16.mxu0 0
        %707 = vmatmul.mubr.bf16.gmra.mrb[0].mxu0 %v672
        %v708 = vpop.f32.mrb[0].mxu0
        %v709 = vadd.f32 %v657, %v708
        %v710 = vpop.f32.mrb[0].mxu0
        %v711 = vpop.f32.mrb[0].mxu0
        %v712 = vpop.f32.mrb[0].mxu0
        %713 = vdwg.mxu0
        %715 = vrot.lane.b32.xlu0 %v709, 120
        %v716 = vpop.permute.xlu0 %715
        %718 = vrot.lane.b32.xlu0 %v709, 112
        %v719 = vpop.permute.xlu0 %718
        %721 = vrot.lane.b32.xlu0 %v709, 104
        %v722 = vpop.permute.xlu0 %721
        %v724 = vpack.c.bf16 %v709, %v709
        %v725 = vpack.c.bf16 %v716, %v716
        %v726 = vpack.c.bf16 %v719, %v719
        %v727 = vpack.c.bf16 %v722, %v722
        %v728 = vmul.f32 %v709, 0.35355338
        %v729 = vmul.f32 %v716, 0.35355338
        %v730 = vmul.f32 %v719, 0.35355338
        %v731 = vmul.f32 %v722, 0.35355338
        %v732 = vpack.c.bf16 %v728, %v728
        %v733 = vpack.c.bf16 %v729, %v729
        %v734 = vpack.c.bf16 %v730, %v730
        %v735 = vpack.c.bf16 %v731, %v731
        %737 = vrot.lane.b32.xlu0 %v732, 96
        %v738 = vpop.permute.xlu0 %737
        %vm739 = vcmask 64512
        %v741 = vsel %vm739, %v738, 0
        %v744 = vsel %vm739, %v724, 0
        %746 = vmatprep.subr.bf16.mxu0 0
        %747 = vmatpush1.bf16.xpose.msra.mxu0 %v744
        %748 = vmatprep.subr.bf16.mxu0 0
        %749 = vmatpush1.bf16.xpose.msra.mxu0 0
        %750 = vmatprep.subr.bf16.mxu0 0
        %751 = vmatpush1.bf16.xpose.msra.mxu0 0
        %752 = vmatprep.subr.bf16.mxu0 0
        %753 = vmatpush1.bf16.xpose.msra.mxu0 0
        %754 = vmatprep.subr.bf16.mxu0 0
        %755 = vmatpush1.bf16.xpose.msra.mxu0 0
        %756 = vmatprep.subr.bf16.mxu0 0
        %757 = vmatpush1.bf16.xpose.msra.mxu0 0
        %758 = vmatprep.subr.bf16.mxu0 0
        %759 = vmatpush1.bf16.xpose.msra.mxu0 0
        %760 = vmatprep.subr.bf16.mxu0 0
        %761 = vmatpush1.bf16.xpose.msra.mxu0 0
        %762 = vmatprep.subr.bf16.mxu0 0
        %763 = vmatpush1.bf16.xpose.msra.mxu0 0
        %764 = vmatprep.subr.bf16.mxu0 0
        %765 = vmatpush1.bf16.xpose.msra.mxu0 0
        %766 = vmatprep.subr.bf16.mxu0 0
        %767 = vmatpush1.bf16.xpose.msra.mxu0 0
        %768 = vmatprep.subr.bf16.mxu0 0
        %769 = vmatpush1.bf16.xpose.msra.mxu0 0
        %770 = vmatprep.subr.bf16.mxu0 0
        %771 = vmatpush1.bf16.xpose.msra.mxu0 0
        %772 = vmatprep.subr.bf16.mxu0 0
        %773 = vmatpush1.bf16.xpose.msra.mxu0 0
        %774 = vmatprep.subr.bf16.mxu0 0
        %775 = vmatpush1.bf16.xpose.msra.mxu0 0
        %776 = vmatprep.subr.bf16.mxu0 0
        %777 = vmatpush1.bf16.xpose.msra.mxu0 0
        %778 = vmatprep.mubr.bf16.mxu0 0
        %779 = vmatmul.mubr.bf16.gmra.mrb[0].mxu0 %v741
        %v780 = vpop.f32.mrb[0].mxu0
        %v781 = vadd.f32 0.0, %v780
        %v782 = vpop.f32.mrb[0].mxu0
        %v783 = vpop.f32.mrb[0].mxu0
        %v784 = vpop.f32.mrb[0].mxu0
        %785 = vdwg.mxu0
        %787 = vrot.lane.b32.xlu0 %v733, 96
        %v788 = vpop.permute.xlu0 %787
        %v790 = vsel %vm739, %v788, 0
        %v793 = vsel %vm739, %v725, 0
        %795 = vmatprep.subr.bf16.mxu0 0
        %796 = vmatpush1.bf16.xpose.msra.mxu0 %v793
        %797 = vmatprep.subr.bf16.mxu0 0
        %798 = vmatpush1.bf16.xpose.msra.mxu0 0
        %799 = vmatprep.subr.bf16.mxu0 0
        %800 = vmatpush1.bf16.xpose.msra.mxu0 0
        %801 = vmatprep.subr.bf16.mxu0 0
        %802 = vmatpush1.bf16.xpose.msra.mxu0 0
        %803 = vmatprep.subr.bf16.mxu0 0
        %804 = vmatpush1.bf16.xpose.msra.mxu0 0
        %805 = vmatprep.subr.bf16.mxu0 0
        %806 = vmatpush1.bf16.xpose.msra.mxu0 0
        %807 = vmatprep.subr.bf16.mxu0 0
        %808 = vmatpush1.bf16.xpose.msra.mxu0 0
        %809 = vmatprep.subr.bf16.mxu0 0
        %810 = vmatpush1.bf16.xpose.msra.mxu0 0
        %811 = vmatprep.subr.bf16.mxu0 0
        %812 = vmatpush1.bf16.xpose.msra.mxu0 0
        %813 = vmatprep.subr.bf16.mxu0 0
        %814 = vmatpush1.bf16.xpose.msra.mxu0 0
        %815 = vmatprep.subr.bf16.mxu0 0
        %816 = vmatpush1.bf16.xpose.msra.mxu0 0
        %817 = vmatprep.subr.bf16.mxu0 0
        %818 = vmatpush1.bf16.xpose.msra.mxu0 0
        %819 = vmatprep.subr.bf16.mxu0 0
        %820 = vmatpush1.bf16.xpose.msra.mxu0 0
        %821 = vmatprep.subr.bf16.mxu0 0
        %822 = vmatpush1.bf16.xpose.msra.mxu0 0
        %823 = vmatprep.subr.bf16.mxu0 0
        %824 = vmatpush1.bf16.xpose.msra.mxu0 0
        %825 = vmatprep.subr.bf16.mxu0 0
        %826 = vmatpush1.bf16.xpose.msra.mxu0 0
        %827 = vmatprep.mubr.bf16.mxu0 0
        %828 = vmatmul.mubr.bf16.gmra.mrb[0].mxu0 %v790
        %v829 = vpop.f32.mrb[0].mxu0
        %v830 = vadd.f32 0.0, %v829
        %v831 = vpop.f32.mrb[0].mxu0
        %v832 = vpop.f32.mrb[0].mxu0
        %v833 = vpop.f32.mrb[0].mxu0
        %834 = vdwg.mxu0
        %836 = vrot.lane.b32.xlu0 %v734, 96
        %v837 = vpop.permute.xlu0 %836
        %v839 = vsel %vm739, %v837, 0
        %v842 = vsel %vm739, %v726, 0
        %844 = vmatprep.subr.bf16.mxu0 0
        %845 = vmatpush1.bf16.xpose.msra.mxu0 %v842
        %846 = vmatprep.subr.bf16.mxu0 0
        %847 = vmatpush1.bf16.xpose.msra.mxu0 0
        %848 = vmatprep.subr.bf16.mxu0 0
        %849 = vmatpush1.bf16.xpose.msra.mxu0 0
        %850 = vmatprep.subr.bf16.mxu0 0
        %851 = vmatpush1.bf16.xpose.msra.mxu0 0
        %852 = vmatprep.subr.bf16.mxu0 0
        %853 = vmatpush1.bf16.xpose.msra.mxu0 0
        %854 = vmatprep.subr.bf16.mxu0 0
        %855 = vmatpush1.bf16.xpose.msra.mxu0 0
        %856 = vmatprep.subr.bf16.mxu0 0
        %857 = vmatpush1.bf16.xpose.msra.mxu0 0
        %858 = vmatprep.subr.bf16.mxu0 0
        %859 = vmatpush1.bf16.xpose.msra.mxu0 0
        %860 = vmatprep.subr.bf16.mxu0 0
        %861 = vmatpush1.bf16.xpose.msra.mxu0 0
        %862 = vmatprep.subr.bf16.mxu0 0
        %863 = vmatpush1.bf16.xpose.msra.mxu0 0
        %864 = vmatprep.subr.bf16.mxu0 0
        %865 = vmatpush1.bf16.xpose.msra.mxu0 0
        %866 = vmatprep.subr.bf16.mxu0 0
        %867 = vmatpush1.bf16.xpose.msra.mxu0 0
        %868 = vmatprep.subr.bf16.mxu0 0
        %869 = vmatpush1.bf16.xpose.msra.mxu0 0
        %870 = vmatprep.subr.bf16.mxu0 0
        %871 = vmatpush1.bf16.xpose.msra.mxu0 0
        %872 = vmatprep.subr.bf16.mxu0 0
        %873 = vmatpush1.bf16.xpose.msra.mxu0 0
        %874 = vmatprep.subr.bf16.mxu0 0
        %875 = vmatpush1.bf16.xpose.msra.mxu0 0
        %876 = vmatprep.mubr.bf16.mxu0 0
        %877 = vmatmul.mubr.bf16.gmra.mrb[0].mxu0 %v839
        %v878 = vpop.f32.mrb[0].mxu0
        %v879 = vadd.f32 0.0, %v878
        %v880 = vpop.f32.mrb[0].mxu0
        %v881 = vpop.f32.mrb[0].mxu0
        %v882 = vpop.f32.mrb[0].mxu0
        %883 = vdwg.mxu0
        %885 = vrot.lane.b32.xlu0 %v735, 96
        %v886 = vpop.permute.xlu0 %885
        %v888 = vsel %vm739, %v886, 0
        %v891 = vsel %vm739, %v727, 0
        %893 = vmatprep.subr.bf16.mxu0 0
        %894 = vmatpush1.bf16.xpose.msra.mxu0 %v891
        %895 = vmatprep.subr.bf16.mxu0 0
        %896 = vmatpush1.bf16.xpose.msra.mxu0 0
        %897 = vmatprep.subr.bf16.mxu0 0
        %898 = vmatpush1.bf16.xpose.msra.mxu0 0
        %899 = vmatprep.subr.bf16.mxu0 0
        %900 = vmatpush1.bf16.xpose.msra.mxu0 0
        %901 = vmatprep.subr.bf16.mxu0 0
        %902 = vmatpush1.bf16.xpose.msra.mxu0 0
        %903 = vmatprep.subr.bf16.mxu0 0
        %904 = vmatpush1.bf16.xpose.msra.mxu0 0
        %905 = vmatprep.subr.bf16.mxu0 0
        %906 = vmatpush1.bf16.xpose.msra.mxu0 0
        %907 = vmatprep.subr.bf16.mxu0 0
        %908 = vmatpush1.bf16.xpose.msra.mxu0 0
        %909 = vmatprep.subr.bf16.mxu0 0
        %910 = vmatpush1.bf16.xpose.msra.mxu0 0
        %911 = vmatprep.subr.bf16.mxu0 0
        %912 = vmatpush1.bf16.xpose.msra.mxu0 0
        %913 = vmatprep.subr.bf16.mxu0 0
        %914 = vmatpush1.bf16.xpose.msra.mxu0 0
        %915 = vmatprep.subr.bf16.mxu0 0
        %916 = vmatpush1.bf16.xpose.msra.mxu0 0
        %917 = vmatprep.subr.bf16.mxu0 0
        %918 = vmatpush1.bf16.xpose.msra.mxu0 0
        %919 = vmatprep.subr.bf16.mxu0 0
        %920 = vmatpush1.bf16.xpose.msra.mxu0 0
        %921 = vmatprep.subr.bf16.mxu0 0
        %922 = vmatpush1.bf16.xpose.msra.mxu0 0
        %923 = vmatprep.subr.bf16.mxu0 0
        %924 = vmatpush1.bf16.xpose.msra.mxu0 0
        %925 = vmatprep.mubr.bf16.mxu0 0
        %926 = vmatmul.mubr.bf16.gmra.mrb[0].mxu0 %v888
        %v927 = vpop.f32.mrb[0].mxu0
        %v928 = vadd.f32 0.0, %v927
        %v929 = vpop.f32.mrb[0].mxu0
        %v930 = vpop.f32.mrb[0].mxu0
        %v931 = vpop.f32.mrb[0].mxu0
        %932 = vdwg.mxu0
        %v933 = vlaneseq
        %v934 = vshrl.u32 %v933, 7
        %v935 = vlaneseq
        %v936 = vand.u32 %v935, 127
        %vm937 = vcmp.le.s32.totalorder %v936, %v934
        %v938 = vsel %vm937, 1, 0
        %vm939 = vcmp.eq.s32.totalorder %v938, 1
        %v940 = vsel %vm939, %v781, -1e+30
        %v941 = vsel %vm939, %v830, -1e+30
        %v942 = vsel %vm939, %v879, -1e+30
        %v943 = vsel %vm939, %v928, -1e+30
        %v944 = vsel %vm739, %v940, -inf
        %945 = vmax.xlane.f32.xlu0 %v944
        %v946 = vpop.xlane.xlu0 %945
        %v947 = vsel %vm739, %v941, -inf
        %948 = vmax.xlane.f32.xlu0 %v947
        %v949 = vpop.xlane.xlu0 %948
        %v950 = vsel %vm739, %v942, -inf
        %951 = vmax.xlane.f32.xlu0 %v950
        %v952 = vpop.xlane.xlu0 %951
        %v953 = vsel %vm739, %v943, -inf
        %954 = vmax.xlane.f32.xlu0 %v953
        %v955 = vpop.xlane.xlu0 %954
        %v956 = vsub.f32 %v940, %v946
        %v957 = vsub.f32 %v941, %v949
        %v958 = vsub.f32 %v942, %v952
        %v959 = vsub.f32 %v943, %v955
        %v960 = vmul.f32 %v956, 1.442695
        %v961 = vpow.pop %v960
        %v962 = vmul.f32 %v957, 1.442695
        %v963 = vpow.pop %v962
        %v964 = vmul.f32 %v958, 1.442695
        %v965 = vpow.pop %v964
        %v966 = vmul.f32 %v959, 1.442695
        %v967 = vpow.pop %v966
        %v968 = vsel %vm739, %v961, 0.0
        %969 = vadd.xlane.f32.xlu0 %v968
        %v970 = vpop.xlane.xlu0 %969
        %v971 = vsel %vm739, %v963, 0.0
        %972 = vadd.xlane.f32.xlu0 %v971
        %v973 = vpop.xlane.xlu0 %972
        %v974 = vsel %vm739, %v965, 0.0
        %975 = vadd.xlane.f32.xlu0 %v974
        %v976 = vpop.xlane.xlu0 %975
        %v977 = vsel %vm739, %v967, 0.0
        %978 = vadd.xlane.f32.xlu0 %v977
        %v979 = vpop.xlane.xlu0 %978
        %v980 = vrcp.pop %v970
        %v981 = vrcp.pop %v973
        %v982 = vrcp.pop %v976
        %v983 = vrcp.pop %v979
        %v984 = vmul.f32 %v961, %v980
        %v985 = vmul.f32 %v963, %v981
        %v986 = vmul.f32 %v965, %v982
        %v987 = vmul.f32 %v967, %v983
        %v988 = vpack.c.bf16 %v984, %v984
        %v989 = vpack.c.bf16 %v985, %v985
        %v990 = vpack.c.bf16 %v986, %v986
        %v991 = vpack.c.bf16 %v987, %v987
        %993 = vrot.lane.b32.xlu0 %v724, 64
        %v994 = vpop.permute.xlu0 %993
        %v996 = vsel %vm739, %v988, 0
        %vm998 = vcmask 1043456
        %v1000 = vsel %vm998, %v994, 0
        %1002 = vmatprep.subr.bf16.mxu0 0
        %1003 = vmatpush1.bf16.msra.mxu0 %v1000
        %1004 = vmatprep.subr.bf16.mxu0 0
        %1005 = vmatpush1.bf16.msra.mxu0 0
        %1006 = vmatprep.subr.bf16.mxu0 0
        %1007 = vmatpush1.bf16.msra.mxu0 0
        %1008 = vmatprep.subr.bf16.mxu0 0
        %1009 = vmatpush1.bf16.msra.mxu0 0
        %1010 = vmatprep.subr.bf16.mxu0 0
        %1011 = vmatpush1.bf16.msra.mxu0 0
        %1012 = vmatprep.subr.bf16.mxu0 0
        %1013 = vmatpush1.bf16.msra.mxu0 0
        %1014 = vmatprep.subr.bf16.mxu0 0
        %1015 = vmatpush1.bf16.msra.mxu0 0
        %1016 = vmatprep.subr.bf16.mxu0 0
        %1017 = vmatpush1.bf16.msra.mxu0 0
        %1018 = vmatprep.subr.bf16.mxu0 0
        %1019 = vmatpush1.bf16.msra.mxu0 0
        %1020 = vmatprep.subr.bf16.mxu0 0
        %1021 = vmatpush1.bf16.msra.mxu0 0
        %1022 = vmatprep.subr.bf16.mxu0 0
        %1023 = vmatpush1.bf16.msra.mxu0 0
        %1024 = vmatprep.subr.bf16.mxu0 0
        %1025 = vmatpush1.bf16.msra.mxu0 0
        %1026 = vmatprep.subr.bf16.mxu0 0
        %1027 = vmatpush1.bf16.msra.mxu0 0
        %1028 = vmatprep.subr.bf16.mxu0 0
        %1029 = vmatpush1.bf16.msra.mxu0 0
        %1030 = vmatprep.subr.bf16.mxu0 0
        %1031 = vmatpush1.bf16.msra.mxu0 0
        %1032 = vmatprep.subr.bf16.mxu0 0
        %1033 = vmatpush1.bf16.msra.mxu0 0
        %1034 = vmatprep.mubr.bf16.mxu0 0
        %1035 = vmatmul.mubr.bf16.gmra.mrb[0].mxu0 %v996
        %v1036 = vpop.f32.mrb[0].mxu0
        %v1037 = vadd.f32 0.0, %v1036
        %v1038 = vpop.f32.mrb[0].mxu0
        %v1039 = vpop.f32.mrb[0].mxu0
        %v1040 = vpop.f32.mrb[0].mxu0
        %1041 = vdwg.mxu0
        %1043 = vrot.lane.b32.xlu0 %v725, 64
        %v1044 = vpop.permute.xlu0 %1043
        %v1046 = vsel %vm739, %v989, 0
        %v1049 = vsel %vm998, %v1044, 0
        %1051 = vmatprep.subr.bf16.mxu0 0
        %1052 = vmatpush1.bf16.msra.mxu0 %v1049
        %1053 = vmatprep.subr.bf16.mxu0 0
        %1054 = vmatpush1.bf16.msra.mxu0 0
        %1055 = vmatprep.subr.bf16.mxu0 0
        %1056 = vmatpush1.bf16.msra.mxu0 0
        %1057 = vmatprep.subr.bf16.mxu0 0
        %1058 = vmatpush1.bf16.msra.mxu0 0
        %1059 = vmatprep.subr.bf16.mxu0 0
        %1060 = vmatpush1.bf16.msra.mxu0 0
        %1061 = vmatprep.subr.bf16.mxu0 0
        %1062 = vmatpush1.bf16.msra.mxu0 0
        %1063 = vmatprep.subr.bf16.mxu0 0
        %1064 = vmatpush1.bf16.msra.mxu0 0
        %1065 = vmatprep.subr.bf16.mxu0 0
        %1066 = vmatpush1.bf16.msra.mxu0 0
        %1067 = vmatprep.subr.bf16.mxu0 0
        %1068 = vmatpush1.bf16.msra.mxu0 0
        %1069 = vmatprep.subr.bf16.mxu0 0
        %1070 = vmatpush1.bf16.msra.mxu0 0
        %1071 = vmatprep.subr.bf16.mxu0 0
        %1072 = vmatpush1.bf16.msra.mxu0 0
        %1073 = vmatprep.subr.bf16.mxu0 0
        %1074 = vmatpush1.bf16.msra.mxu0 0
        %1075 = vmatprep.subr.bf16.mxu0 0
        %1076 = vmatpush1.bf16.msra.mxu0 0
        %1077 = vmatprep.subr.bf16.mxu0 0
        %1078 = vmatpush1.bf16.msra.mxu0 0
        %1079 = vmatprep.subr.bf16.mxu0 0
        %1080 = vmatpush1.bf16.msra.mxu0 0
        %1081 = vmatprep.subr.bf16.mxu0 0
        %1082 = vmatpush1.bf16.msra.mxu0 0
        %1083 = vmatprep.mubr.bf16.mxu0 0
        %1084 = vmatmul.mubr.bf16.gmra.mrb[0].mxu0 %v1046
        %v1085 = vpop.f32.mrb[0].mxu0
        %v1086 = vadd.f32 0.0, %v1085
        %v1087 = vpop.f32.mrb[0].mxu0
        %v1088 = vpop.f32.mrb[0].mxu0
        %v1089 = vpop.f32.mrb[0].mxu0
        %1090 = vdwg.mxu0
        %1092 = vrot.lane.b32.xlu0 %v726, 64
        %v1093 = vpop.permute.xlu0 %1092
        %v1095 = vsel %vm739, %v990, 0
        %v1098 = vsel %vm998, %v1093, 0
        %1100 = vmatprep.subr.bf16.mxu0 0
        %1101 = vmatpush1.bf16.msra.mxu0 %v1098
        %1102 = vmatprep.subr.bf16.mxu0 0
        %1103 = vmatpush1.bf16.msra.mxu0 0
        %1104 = vmatprep.subr.bf16.mxu0 0
        %1105 = vmatpush1.bf16.msra.mxu0 0
        %1106 = vmatprep.subr.bf16.mxu0 0
        %1107 = vmatpush1.bf16.msra.mxu0 0
        %1108 = vmatprep.subr.bf16.mxu0 0
        %1109 = vmatpush1.bf16.msra.mxu0 0
        %1110 = vmatprep.subr.bf16.mxu0 0
        %1111 = vmatpush1.bf16.msra.mxu0 0
        %1112 = vmatprep.subr.bf16.mxu0 0
        %1113 = vmatpush1.bf16.msra.mxu0 0
        %1114 = vmatprep.subr.bf16.mxu0 0
        %1115 = vmatpush1.bf16.msra.mxu0 0
        %1116 = vmatprep.subr.bf16.mxu0 0
        %1117 = vmatpush1.bf16.msra.mxu0 0
        %1118 = vmatprep.subr.bf16.mxu0 0
        %1119 = vmatpush1.bf16.msra.mxu0 0
        %1120 = vmatprep.subr.bf16.mxu0 0
        %1121 = vmatpush1.bf16.msra.mxu0 0
        %1122 = vmatprep.subr.bf16.mxu0 0
        %1123 = vmatpush1.bf16.msra.mxu0 0
        %1124 = vmatprep.subr.bf16.mxu0 0
        %1125 = vmatpush1.bf16.msra.mxu0 0
        %1126 = vmatprep.subr.bf16.mxu0 0
        %1127 = vmatpush1.bf16.msra.mxu0 0
        %1128 = vmatprep.subr.bf16.mxu0 0
        %1129 = vmatpush1.bf16.msra.mxu0 0
        %1130 = vmatprep.subr.bf16.mxu0 0
        %1131 = vmatpush1.bf16.msra.mxu0 0
        %1132 = vmatprep.mubr.bf16.mxu0 0
        %1133 = vmatmul.mubr.bf16.gmra.mrb[0].mxu0 %v1095
        %v1134 = vpop.f32.mrb[0].mxu0
        %v1135 = vadd.f32 0.0, %v1134
        %v1136 = vpop.f32.mrb[0].mxu0
        %v1137 = vpop.f32.mrb[0].mxu0
        %v1138 = vpop.f32.mrb[0].mxu0
        %1139 = vdwg.mxu0
        %1141 = vrot.lane.b32.xlu0 %v727, 64
        %v1142 = vpop.permute.xlu0 %1141
        %v1144 = vsel %vm739, %v991, 0
        %v1147 = vsel %vm998, %v1142, 0
        %1149 = vmatprep.subr.bf16.mxu0 0
        %1150 = vmatpush1.bf16.msra.mxu0 %v1147
        %1151 = vmatprep.subr.bf16.mxu0 0
        %1152 = vmatpush1.bf16.msra.mxu0 0
        %1153 = vmatprep.subr.bf16.mxu0 0
        %1154 = vmatpush1.bf16.msra.mxu0 0
        %1155 = vmatprep.subr.bf16.mxu0 0
        %1156 = vmatpush1.bf16.msra.mxu0 0
        %1157 = vmatprep.subr.bf16.mxu0 0
        %1158 = vmatpush1.bf16.msra.mxu0 0
        %1159 = vmatprep.subr.bf16.mxu0 0
        %1160 = vmatpush1.bf16.msra.mxu0 0
        %1161 = vmatprep.subr.bf16.mxu0 0
        %1162 = vmatpush1.bf16.msra.mxu0 0
        %1163 = vmatprep.subr.bf16.mxu0 0
        %1164 = vmatpush1.bf16.msra.mxu0 0
        %1165 = vmatprep.subr.bf16.mxu0 0
        %1166 = vmatpush1.bf16.msra.mxu0 0
        %1167 = vmatprep.subr.bf16.mxu0 0
        %1168 = vmatpush1.bf16.msra.mxu0 0
        %1169 = vmatprep.subr.bf16.mxu0 0
        %1170 = vmatpush1.bf16.msra.mxu0 0
        %1171 = vmatprep.subr.bf16.mxu0 0
        %1172 = vmatpush1.bf16.msra.mxu0 0
        %1173 = vmatprep.subr.bf16.mxu0 0
        %1174 = vmatpush1.bf16.msra.mxu0 0
        %1175 = vmatprep.subr.bf16.mxu0 0
        %1176 = vmatpush1.bf16.msra.mxu0 0
        %1177 = vmatprep.subr.bf16.mxu0 0
        %1178 = vmatpush1.bf16.msra.mxu0 0
        %1179 = vmatprep.subr.bf16.mxu0 0
        %1180 = vmatpush1.bf16.msra.mxu0 0
        %1181 = vmatprep.mubr.bf16.mxu0 0
        %1182 = vmatmul.mubr.bf16.gmra.mrb[0].mxu0 %v1144
        %v1183 = vpop.f32.mrb[0].mxu0
        %v1184 = vadd.f32 0.0, %v1183
        %v1185 = vpop.f32.mrb[0].mxu0
        %v1186 = vpop.f32.mrb[0].mxu0
        %v1187 = vpop.f32.mrb[0].mxu0
        %1188 = vdwg.mxu0
        %1190 = vrot.lane.b32.xlu0 %v1086, 8
        %v1191 = vpop.permute.xlu0 %1190
        %1194 = vrot.lane.b32.xlu0 %v1135, 16
        %v1195 = vpop.permute.xlu0 %1194
        %1198 = vrot.lane.b32.xlu0 %v1184, 24
        %v1199 = vpop.permute.xlu0 %1198
        %v1201 = vsel %vm739, %v1037, %v1191
        %vm1202 = vcmask 130048
        %v1203 = vsel %vm1202, %v1201, %v1195
        %vm1204 = vcmask 195584
        %v1205 = vsel %vm1204, %v1203, %v1199
        %v1206 = vpack.c.bf16 %v1205, %v1205
        %v1207 = vld [vmem:[#allocation11] sm:$0xf]
        %v1208 = vld [vmem:[#allocation11 + $0x4] sm:$0xf]
        %v1209 = vld [vmem:[#allocation11 + $0x8] sm:$0xf]
        %v1210 = vld [vmem:[#allocation11 + $0xc] sm:$0xf]
        %v1211 = vld [vmem:[#allocation13] sm:$0x1]
        %v1213 = vlaneseq
        %v1214 = vshrl.u32 %v1213, 7
        %v1215 = vsub.s32 0, %v1214
        %v1216 = vrot.slane %v1211, %v1215
        %v1222 = vunpack.c.l.b16 %v1207
        %v1223 = vunpack.c.l.b16 %v1208
        %v1224 = vunpack.c.l.b16 %v1209
        %v1225 = vunpack.c.l.b16 %v1210
        %v1226 = vpack.c.b16 %v1223, %v1222
        %v1227 = vpack.c.b16 %v1225, %v1224
        %v1231 = vsel %vm618, %v1206, 0
        %1233 = vmatprep.subr.bf16.mxu0 0
        %1234 = vmatpush1.bf16.msra.mxu0 %v1226
        %1235 = vmatprep.subr.bf16.mxu0 0
        %1236 = vmatpush1.bf16.msra.mxu0 %v1227
        %1237 = vmatprep.subr.bf16.mxu0 0
        %1238 = vmatpush1.bf16.msra.mxu0 0
        %1239 = vmatprep.subr.bf16.mxu0 0
        %1240 = vmatpush1.bf16.msra.mxu0 0
        %1241 = vmatprep.subr.bf16.mxu0 0
        %1242 = vmatpush1.bf16.msra.mxu0 0
        %1243 = vmatprep.subr.bf16.mxu0 0
        %1244 = vmatpush1.bf16.msra.mxu0 0
        %1245 = vmatprep.subr.bf16.mxu0 0
        %1246 = vmatpush1.bf16.msra.mxu0 0
        %1247 = vmatprep.subr.bf16.mxu0 0
        %1248 = vmatpush1.bf16.msra.mxu0 0
        %1249 = vmatprep.subr.bf16.mxu0 0
        %1250 = vmatpush1.bf16.msra.mxu0 0
        %1251 = vmatprep.subr.bf16.mxu0 0
        %1252 = vmatpush1.bf16.msra.mxu0 0
        %1253 = vmatprep.subr.bf16.mxu0 0
        %1254 = vmatpush1.bf16.msra.mxu0 0
        %1255 = vmatprep.subr.bf16.mxu0 0
        %1256 = vmatpush1.bf16.msra.mxu0 0
        %1257 = vmatprep.subr.bf16.mxu0 0
        %1258 = vmatpush1.bf16.msra.mxu0 0
        %1259 = vmatprep.subr.bf16.mxu0 0
        %1260 = vmatpush1.bf16.msra.mxu0 0
        %1261 = vmatprep.subr.bf16.mxu0 0
        %1262 = vmatpush1.bf16.msra.mxu0 0
        %1263 = vmatprep.subr.bf16.mxu0 0
        %1264 = vmatpush1.bf16.msra.mxu0 0
        %1265 = vmatprep.mubr.bf16.mxu0 0
        %1266 = vmatmul.mubr.bf16.gmra.mrb[0].mxu0 %v1231
        %v1267 = vpop.f32.mrb[0].mxu0
        %v1268 = vadd.f32 %v1216, %v1267
        %v1269 = vpop.f32.mrb[0].mxu0
        %v1270 = vpop.f32.mrb[0].mxu0
        %v1271 = vpop.f32.mrb[0].mxu0
        %1272 = vdwg.mxu0
        %v1273 = vadd.f32 %v615, %v1268
        %v1274 = vld [vmem:[#allocation14] sm:$0x1]
        %v1275 = vld [vmem:[#allocation16] sm:$0x1]
        %v1276 = vsel %vm618, %v1273, 0.0
        %1277 = vadd.xlane.f32.xlu0 %v1276
        %v1278 = vpop.xlane.xlu0 %1277
        %v1279 = vmul.f32 %v1278, %v622
        %v1280 = vsub.f32 %v1273, %v1279
        %v1281 = vmul.f32 %v1280, %v1280
        %v1282 = vsel %vm618, %v1281, 0.0
        %1283 = vadd.xlane.f32.xlu0 %v1282
        %v1284 = vpop.xlane.xlu0 %1283
        %v1285 = vmul.f32 %v1284, %v622
        %v1286 = vadd.f32 %v1285, 1e-05
        %v1287 = vrsqrt.pop %v1286
        %v1288 = vmul.f32 %v1280, %v1287
        %v1290 = vlaneseq
        %v1291 = vshrl.u32 %v1290, 7
        %v1292 = vsub.s32 0, %v1291
        %v1293 = vrot.slane %v1274, %v1292
        %v1295 = vmul.f32 %v1288, %v1293
        %v1297 = vlaneseq
        %v1298 = vshrl.u32 %v1297, 7
        %v1299 = vsub.s32 0, %v1298
        %v1300 = vrot.slane %v1275, %v1299
        %v1302 = vadd.f32 %v1295, %v1300
        %v1303 = vpack.c.bf16 %v1302, %v1302
        %v1304 = vld [vmem:[#allocation17] sm:$0xf]
        %v1305 = vld [vmem:[#allocation17 + $0x4] sm:$0xf]
        %v1306 = vld [vmem:[#allocation17 + $0x8] sm:$0xf]
        %v1307 = vld [vmem:[#allocation17 + $0xc] sm:$0xf]
        %v1308 = vld [vmem:[#allocation19] sm:$0x1]
        %v1310 = vlaneseq
        %v1311 = vshrl.u32 %v1310, 7
        %v1312 = vsub.s32 0, %v1311
        %v1313 = vrot.slane %v1308, %v1312
        %v1319 = vunpack.c.l.b16 %v1304
        %v1320 = vunpack.c.l.b16 %v1305
        %v1321 = vunpack.c.l.b16 %v1306
        %v1322 = vunpack.c.l.b16 %v1307
        %v1323 = vpack.c.b16 %v1320, %v1319
        %v1324 = vpack.c.b16 %v1322, %v1321
        %v1328 = vsel %vm618, %v1303, 0
        %1330 = vmatprep.subr.bf16.mxu0 0
        %1331 = vmatpush1.bf16.msra.mxu0 %v1323
        %1332 = vmatprep.subr.bf16.mxu0 0
        %1333 = vmatpush1.bf16.msra.mxu0 %v1324
        %1334 = vmatprep.subr.bf16.mxu0 0
        %1335 = vmatpush1.bf16.msra.mxu0 0
        %1336 = vmatprep.subr.bf16.mxu0 0
        %1337 = vmatpush1.bf16.msra.mxu0 0
        %1338 = vmatprep.subr.bf16.mxu0 0
        %1339 = vmatpush1.bf16.msra.mxu0 0
        %1340 = vmatprep.subr.bf16.mxu0 0
        %1341 = vmatpush1.bf16.msra.mxu0 0
        %1342 = vmatprep.subr.bf16.mxu0 0
        %1343 = vmatpush1.bf16.msra.mxu0 0
        %1344 = vmatprep.subr.bf16.mxu0 0
        %1345 = vmatpush1.bf16.msra.mxu0 0
        %1346 = vmatprep.subr.bf16.mxu0 0
        %1347 = vmatpush1.bf16.msra.mxu0 0
        %1348 = vmatprep.subr.bf16.mxu0 0
        %1349 = vmatpush1.bf16.msra.mxu0 0
        %1350 = vmatprep.subr.bf16.mxu0 0
        %1351 = vmatpush1.bf16.msra.mxu0 0
        %1352 = vmatprep.subr.bf16.mxu0 0
        %1353 = vmatpush1.bf16.msra.mxu0 0
        %1354 = vmatprep.subr.bf16.mxu0 0
        %1355 = vmatpush1.bf16.msra.mxu0 0
        %1356 = vmatprep.subr.bf16.mxu0 0
        %1357 = vmatpush1.bf16.msra.mxu0 0
        %1358 = vmatprep.subr.bf16.mxu0 0
        %1359 = vmatpush1.bf16.msra.mxu0 0
        %1360 = vmatprep.subr.bf16.mxu0 0
        %1361 = vmatpush1.bf16.msra.mxu0 0
        %1362 = vmatprep.mubr.bf16.mxu0 0
        %1363 = vmatmul.mubr.bf16.gmra.mrb[0].mxu0 %v1328
        %v1364 = vpop.f32.mrb[0].mxu0
        %v1365 = vadd.f32 %v1313, %v1364
        %v1366 = vpop.f32.mrb[0].mxu0
        %v1367 = vpop.f32.mrb[0].mxu0
        %v1368 = vpop.f32.mrb[0].mxu0
        %1369 = vdwg.mxu0
        %v1370 = vmul.f32 %v1365, 0.5
        %v1371 = vmul.f32 %v1365, %v1365
        %v1372 = vmul.f32 %v1371, %v1365
        %v1373 = vmul.f32 %v1372, 0.044715
        %v1374 = vadd.f32 %v1365, %v1373
        %v1375 = vmul.f32 %v1374, 0.7978846
        %v1376 = vtanh.pop %v1375
        %v1377 = vadd.f32 %v1376, 1.0
        %v1378 = vmul.f32 %v1370, %v1377
        %v1379 = vpack.c.bf16 %v1378, %v1378
        %v1380 = vld [vmem:[#allocation20] sm:$0xf]
        %v1381 = vld [vmem:[#allocation20 + $0x4] sm:$0xf]
        %v1382 = vld [vmem:[#allocation20 + $0x8] sm:$0xf]
        %v1383 = vld [vmem:[#allocation20 + $0xc] sm:$0xf]
        %v1384 = vld [vmem:[#allocation20 + $0x10] sm:$0xf]
        %v1385 = vld [vmem:[#allocation20 + $0x14] sm:$0xf]
        %v1386 = vld [vmem:[#allocation20 + $0x18] sm:$0xf]
        %v1387 = vld [vmem:[#allocation20 + $0x1c] sm:$0xf]
        %v1388 = vld [vmem:[#allocation20 + $0x20] sm:$0xf]
        %v1389 = vld [vmem:[#allocation20 + $0x24] sm:$0xf]
        %v1390 = vld [vmem:[#allocation20 + $0x28] sm:$0xf]
        %v1391 = vld [vmem:[#allocation20 + $0x2c] sm:$0xf]
        %v1392 = vld [vmem:[#allocation20 + $0x30] sm:$0xf]
        %v1393 = vld [vmem:[#allocation20 + $0x34] sm:$0xf]
        %v1394 = vld [vmem:[#allocation20 + $0x38] sm:$0xf]
        %v1395 = vld [vmem:[#allocation20 + $0x3c] sm:$0xf]
        %v1396 = vld [vmem:[#allocation22] sm:$0x1]
        %v1398 = vlaneseq
        %v1399 = vshrl.u32 %v1398, 7
        %v1400 = vsub.s32 0, %v1399
        %v1401 = vrot.slane %v1396, %v1400
        %v1419 = vunpack.c.l.b16 %v1380
        %v1420 = vunpack.c.l.b16 %v1381
        %v1421 = vunpack.c.l.b16 %v1382
        %v1422 = vunpack.c.l.b16 %v1383
        %v1423 = vunpack.c.l.b16 %v1384
        %v1424 = vunpack.c.l.b16 %v1385
        %v1425 = vunpack.c.l.b16 %v1386
        %v1426 = vunpack.c.l.b16 %v1387
        %v1427 = vunpack.c.l.b16 %v1388
        %v1428 = vunpack.c.l.b16 %v1389
        %v1429 = vunpack.c.l.b16 %v1390
        %v1430 = vunpack.c.l.b16 %v1391
        %v1431 = vunpack.c.l.b16 %v1392
        %v1432 = vunpack.c.l.b16 %v1393
        %v1433 = vunpack.c.l.b16 %v1394
        %v1434 = vunpack.c.l.b16 %v1395
        %v1435 = vpack.c.b16 %v1420, %v1419
        %v1436 = vpack.c.b16 %v1422, %v1421
        %v1437 = vpack.c.b16 %v1424, %v1423
        %v1438 = vpack.c.b16 %v1426, %v1425
        %v1439 = vpack.c.b16 %v1428, %v1427
        %v1440 = vpack.c.b16 %v1430, %v1429
        %v1441 = vpack.c.b16 %v1432, %v1431
        %v1442 = vpack.c.b16 %v1434, %v1433
        %1451 = vmatprep.subr.bf16.mxu0 0
        %1452 = vmatpush1.bf16.msra.mxu0 %v1435
        %1453 = vmatprep.subr.bf16.mxu0 0
        %1454 = vmatpush1.bf16.msra.mxu0 %v1436
        %1455 = vmatprep.subr.bf16.mxu0 0
        %1456 = vmatpush1.bf16.msra.mxu0 %v1437
        %1457 = vmatprep.subr.bf16.mxu0 0
        %1458 = vmatpush1.bf16.msra.mxu0 %v1438
        %1459 = vmatprep.subr.bf16.mxu0 0
        %1460 = vmatpush1.bf16.msra.mxu0 %v1439
        %1461 = vmatprep.subr.bf16.mxu0 0
        %1462 = vmatpush1.bf16.msra.mxu0 %v1440
        %1463 = vmatprep.subr.bf16.mxu0 0
        %1464 = vmatpush1.bf16.msra.mxu0 %v1441
        %1465 = vmatprep.subr.bf16.mxu0 0
        %1466 = vmatpush1.bf16.msra.mxu0 %v1442
        %1467 = vmatprep.subr.bf16.mxu0 0
        %1468 = vmatpush1.bf16.msra.mxu0 0
        %1469 = vmatprep.subr.bf16.mxu0 0
        %1470 = vmatpush1.bf16.msra.mxu0 0
        %1471 = vmatprep.subr.bf16.mxu0 0
        %1472 = vmatpush1.bf16.msra.mxu0 0
        %1473 = vmatprep.subr.bf16.mxu0 0
        %1474 = vmatpush1.bf16.msra.mxu0 0
        %1475 = vmatprep.subr.bf16.mxu0 0
        %1476 = vmatpush1.bf16.msra.mxu0 0
        %1477 = vmatprep.subr.bf16.mxu0 0
        %1478 = vmatpush1.bf16.msra.mxu0 0
        %1479 = vmatprep.subr.bf16.mxu0 0
        %1480 = vmatpush1.bf16.msra.mxu0 0
        %1481 = vmatprep.subr.bf16.mxu0 0
        %1482 = vmatpush1.bf16.msra.mxu0 0
        %1483 = vmatprep.mubr.bf16.mxu0 0
        %1484 = vmatmul.mubr.bf16.gmra.mrb[0].mxu0 %v1379
        %v1485 = vpop.f32.mrb[0].mxu0
        %v1486 = vadd.f32 %v1401, %v1485
        %v1487 = vpop.f32.mrb[0].mxu0
        %v1488 = vpop.f32.mrb[0].mxu0
        %v1489 = vpop.f32.mrb[0].mxu0
        %1490 = vdwg.mxu0
        %v1491 = vadd.f32 %v1273, %v1486
        %1492 = vst.msk [vmem:[%s613] sm:$0xff] %vm618, %v1491
        %s1493 = sand.u32 %s322, 1
        %s1494 = scalar_lea.sflag [#allocation4], %s1493
        %s1495 = sand.u32 %s322, 1
        %s1496 = smul.addr %s1495, 8
        %s1497 = scalar_lea.vmem [#allocation23], %s1496
        // Predicated region
        $region125: #{tpu_custom_call.1} parent=71 // pred_check
          %p1498 = pneg %p332
        $region126: #{tpu_custom_call.1} parent=71 // pred_check_branch
          %1500 = sbr.rel (%p1498) target = $region128
        $region127: #{tpu_custom_call.1} parent=71 // pred_region
          %s1502 = ssub.s32 128, 128
          %1503 = vsyncadd %s1494, %s1502
          %s1504 = smul.addr %s36, 128
          %s1505 = scalar_lea.hbm %s13, %s1504
          %s1507 = sshll.u32 %s1497, 4
          %s1508 = int_to_ptr.vmem [resolvable:$true] %s1507
          %1510 = dma.vmem_to_hbm [thread:$0]  %s1508, 128, %s1505, %s1494
        $region128: #{tpu_custom_call.1} parent=71 // pred_fallthru
          _
      $region72: #{tpu_custom_call.1} parent=5 // pred_fallthru
        _
      %p1511 = scmp.le.s32.totalorder 2, %s31
      // Predicated region
      $region129: #{tpu_custom_call.1} parent=5 // pred_check
        %p1512 = pneg %p1511
      $region130: #{tpu_custom_call.1} parent=5 // pred_check_branch
        %1514 = sbr.rel (%p1512) target = $region132
      $region131: #{tpu_custom_call.1} parent=5 // pred_region
        %s1515 = ssub.s32 %s31, 2
        // Predicated region
        $region133: #{tpu_custom_call.1} parent=131 // pred_check
          %p1516 = pneg %p338
        $region134: #{tpu_custom_call.1} parent=131 // pred_check_branch
          %1518 = sbr.rel (%p1516) target = $region136
        $region135: #{tpu_custom_call.1} parent=131 // pred_region
          %s1519 = sand.u32 %s323, 1
          %s1520 = scalar_lea.sflag [#allocation4], %s1519
          %s1521 = sand.u32 %s323, 1
          %s1522 = smul.addr %s1521, 8
          %s1523 = scalar_lea.vmem [#allocation23], %s1522
          %1524 = dma.done %s1520, 128
        $region136: #{tpu_custom_call.1} parent=131 // pred_fallthru
          _
      $region132: #{tpu_custom_call.1} parent=5 // pred_fallthru
        _
    $region6: #{tpu_custom_call.1} parent=1 // loop_footer
      %s35 = sadd.s32 1, %s31
    $region7: #{tpu_custom_call.1} parent=1 // loop_footer_branch
      %30 = sbr.rel target = $region3
    $region8: #{tpu_custom_call.1} parent=1 // loop_exit
      _
    %1525 = vsyncpa [#allocation3], 1
    %s1526 = scalar_lea.sflag [#allocation3], 1
    %1527 = vsyncpa %s1526, 1
    %1528 = vsyncpa [#allocation6], 1
    %1529 = vsyncpa [#allocation9], 1
    %1530 = vsyncpa [#allocation12], 1
    %1531 = vsyncpa [#allocation15], 1
    %1532 = vsyncpa [#allocation18], 1
    %1533 = vsyncpa [#allocation21], 1
    %1534 = vsyncpa [#allocation4], 1
    %s1535 = scalar_lea.sflag [#allocation4], 1
    %1536 = vsyncpa %s1535, 1

</llo_original>
